<compile_context>
chip_gen: v7x
topology: tpu7x:2x2x1
jax: 0.10.0
libtpu: 0.0.40
codegen_flags: <defaults>
</compile_context>

<pallas_src>
import math

import jax
import jax.numpy as jnp
from jax import lax
from jax.experimental import pallas as pl
from jax.experimental.pallas import tpu as pltpu

EPS = 1e-5
HALO = 8   # sublane-aligned halo offset for the conv2 input scratch


def pairwise_cnn_forward(x_ncw, p):
    """x_ncw: (B, 2, L) float32 in PyTorch NCW layout.  Returns (B, 1) f32."""
    B, cin, L = x_ncw.shape
    assert cin == 2 and L % 4 == 0
    L2, L4 = L // 2, L // 4
    BL, BL2 = B * L, B * L2
    C1 = p['conv1_w'].shape[0]        # 8
    C2 = p['conv2_w'].shape[0]        # 16
    F1 = p['fc1_w'].shape[0]          # 120
    assert p['fc1_w'].shape[1] == C2 * L4
    assert C1 <= 128 and C2 <= 128 and F1 <= 128
    f32, bf16 = jnp.float32, jnp.bfloat16

    # ------------- parameter / input re-layout (plain JAX glue) -------------
    # activation rows r = b*L + l, channels last.
    x2d = jnp.transpose(x_ncw, (0, 2, 1)).reshape(BL, cin).astype(f32)

    # per-sample conv padding masks (zero the prev/next tap at sample
    # boundaries; they also kill cross-batch leakage of the shifted reads).
    l1 = jnp.tile(jnp.arange(L), B)
    l2i = jnp.tile(jnp.arange(L2), B)
    mprev1 = (l1 != 0).astype(f32)
    mnext1 = (l1 != L - 1).astype(f32)
    mprev2 = (l2i != 0).astype(f32)
    mnext2 = (l2i != L2 - 1).astype(f32)

    # packed input slab: one zero halo row each side; cols = [x(2), masks(4)].
    xp = jnp.zeros((BL + 2, 6), f32)
    xp = xp.at[1:BL + 1, 0:2].set(x2d)
    xp = xp.at[1:BL + 1, 2].set(mprev1)
    xp = xp.at[1:BL + 1, 3].set(mnext1)
    xp = xp.at[1:BL2 + 1, 4].set(mprev2)
    xp = xp.at[1:BL2 + 1, 5].set(mnext2)

    # fold BatchNorm (eval mode) + conv bias into weights / additive shifts.
    # TODO(synk): BatchNorm uses folded running statistics (inference mode);
    # training-mode per-batch statistics are not computed in-kernel.
    sc1 = p['bn1_g'] / jnp.sqrt(p['bn1_v'] + EPS)
    sh1 = (p['conv1_b'] - p['bn1_m']) * sc1 + p['bn1_b']
    sc2 = p['bn2_g'] / jnp.sqrt(p['bn2_v'] + EPS)
    sh2 = (p['conv2_b'] - p['bn2_m']) * sc2 + p['bn2_b']

    # conv weights stacked tap-major: row = k*Cin + cin, col = cout.
    wc1 = (jnp.transpose(p['conv1_w'], (2, 1, 0)).reshape(3 * cin, C1)
           * sc1[None, :]).astype(bf16)                       # (6, 8)
    wc2 = (jnp.transpose(p['conv2_w'], (2, 1, 0)).reshape(3 * C1, C2)
           * sc2[None, :]).astype(bf16)                       # (24, 16)

    # fc1: kernel flatten order is l4*C2 + c; PyTorch order is c*L4 + l4.
    wf1 = (p['fc1_w'].reshape(F1, C2, L4).transpose(0, 2, 1)
           .reshape(F1, C2 * L4).T).astype(bf16)              # (240, 120)
    wf3 = p['fc3_w'].T.astype(bf16)                           # (120, 1)

    # one packed vector input for all small per-layer shifts/biases
    # (128-lane aligned segments so in-kernel slices need no lane rotations).
    OFF_SH1, OFF_SH2, OFF_FB1, OFF_FB3 = 0, 128, 256, 384
    vec = jnp.zeros((1, 512), f32)
    vec = vec.at[0, OFF_SH1:OFF_SH1 + C1].set(sh1)
    vec = vec.at[0, OFF_SH2:OFF_SH2 + C2].set(sh2)
    vec = vec.at[0, OFF_FB1:OFF_FB1 + F1].set(p['fc1_b'])
    vec = vec.at[0, OFF_FB3:OFF_FB3 + 1].set(p['fc3_b'])

    # ------------------------------ the kernel ------------------------------
    def kernel(xp_ref, wc1_ref, wc2_ref, wf1_ref, wf3_ref, vec_ref, out_ref,
               h1_scr, p1_scr, h2_scr):
        sh1_v = vec_ref[:, OFF_SH1:OFF_SH1 + C1]
        sh2_v = vec_ref[:, OFF_SH2:OFF_SH2 + C2]
        fb1_v = vec_ref[:, OFF_FB1:OFF_FB1 + F1]
        fb3_v = vec_ref[:, OFF_FB3:OFF_FB3 + 1]

        # conv1 (k=3, pad=1) + bn1 + relu : one (BL, 6) @ (6, C1) matmul.
        cur = xp_ref[pl.ds(1, BL), :]                    # (BL, 6)
        x_c = cur[:, 0:2]
        x_p = xp_ref[pl.ds(0, BL), 0:2] * cur[:, 2:3]    # x[l-1], 0 at l == 0
        x_n = xp_ref[pl.ds(2, BL), 0:2] * cur[:, 3:4]    # x[l+1], 0 at l == L-1
        xcat = jnp.concatenate([x_p, x_c, x_n], axis=1)  # (BL, 6)
        h1 = jnp.dot(xcat.astype(bf16), wc1_ref[...],
                     preferred_element_type=jnp.float32) + sh1_v
        h1 = jnp.maximum(h1, 0.0)                        # (BL, C1)

        # pool1 (k=2, s=2): strided sublane reads, max of even/odd rows.
        h1_scr[...] = h1
        p1 = jnp.maximum(h1_scr[pl.ds(0, BL2, 2), :],
                         h1_scr[pl.ds(1, BL2, 2), :])    # (BL2, C1)

        # conv2 + bn2 + relu : one (BL2, 24) @ (24, C2) matmul.
        # p1 is staged at sublane-ALIGNED offset HALO so all stores stay
        # aligned; the +/-1 shifted views come from (unaligned) loads only.
        p1_scr[...] = jnp.zeros((BL2 + 2 * HALO, C1), jnp.float32)
        p1_scr[pl.ds(HALO, BL2), :] = p1
        m2 = xp_ref[pl.ds(1, BL2), 4:6]                  # (BL2, 2) masks
        p1p = p1_scr[pl.ds(HALO - 1, BL2), :] * m2[:, 0:1]  # p1[l-1], 0 @ l2==0
        p1n = p1_scr[pl.ds(HALO + 1, BL2), :] * m2[:, 1:2]  # p1[l+1], 0 @ l2==L2-1
        pcat = jnp.concatenate([p1p, p1, p1n], axis=1)   # (BL2, 3*C1)
        h2 = jnp.dot(pcat.astype(bf16), wc2_ref[...],
                     preferred_element_type=jnp.float32) + sh2_v
        h2 = jnp.maximum(h2, 0.0)                        # (BL2, C2)

        # pool2 fused with flatten.  First a fully-aligned pairwise max
        # (row r holds max(h2[r], h2[r+1]); only even-l2 rows are used later),
        # then 15 stride-L2 slab reads lane-concatenated into (B, L4*C2).
        h2_scr[...] = jnp.zeros((BL2 + 8, C2), jnp.float32)
        h2_scr[pl.ds(0, BL2), :] = h2
        h2m = jnp.maximum(h2, h2_scr[pl.ds(1, BL2), :])
        h2_scr[pl.ds(0, BL2), :] = h2m
        slabs = []
        for l in range(L4):                              # static unroll
            slabs.append(h2_scr[pl.ds(2 * l, B, L2), :]) # rows b*L2 + 2l
        flat = jnp.concatenate(slabs, axis=1)            # (B, L4*C2)

        # fc1 + relu + fc3 : two batched matmuls for all B at once.
        z = jnp.maximum(jnp.dot(flat.astype(bf16), wf1_ref[...],
                                preferred_element_type=jnp.float32) + fb1_v,
                        0.0)
        out_ref[...] = jnp.dot(z.astype(bf16), wf3_ref[...],
                               preferred_element_type=jnp.float32) + fb3_v

    vmem = pl.BlockSpec(memory_space=pltpu.MemorySpace.VMEM)
    out = pl.pallas_call(
        kernel,
        out_shape=jax.ShapeDtypeStruct((B, 1), f32),
        in_specs=[vmem] * 6,
        out_specs=vmem,
        scratch_shapes=[
            pltpu.VMEM((BL, C1), f32),              # h1 (strided pool1 reads)
            pltpu.VMEM((BL2 + 2 * HALO, C1), f32),  # p1 with aligned zero halo
            pltpu.VMEM((BL2 + 8, C2), f32),         # h2 / pairwise-max staging
        ],
    )(xp, wc1, wc2, wf1, wf3, vec)
    return out


def reference_forward(x_ncw, p):
    """Pure-JAX reference mirroring the PyTorch forward (eval-mode BN)."""
    dn = ('NCH', 'OIH', 'NCH')
    hp = lax.Precision.HIGHEST

    def bn(y, g, b_, m, v):
        return ((y - m[None, :, None]) / jnp.sqrt(v[None, :, None] + EPS)
                * g[None, :, None] + b_[None, :, None])

    y = lax.conv_general_dilated(x_ncw, p['conv1_w'], (1,), [(1, 1)],
                                 dimension_numbers=dn, precision=hp)
    y = y + p['conv1_b'][None, :, None]
    y = jnp.maximum(bn(y, p['bn1_g'], p['bn1_b'], p['bn1_m'], p['bn1_v']), 0.0)
    B, C, L = y.shape
    y = jnp.max(y.reshape(B, C, L // 2, 2), axis=-1)

    y = lax.conv_general_dilated(y, p['conv2_w'], (1,), [(1, 1)],
                                 dimension_numbers=dn, precision=hp)
    y = y + p['conv2_b'][None, :, None]
    y = jnp.maximum(bn(y, p['bn2_g'], p['bn2_b'], p['bn2_m'], p['bn2_v']), 0.0)
    B, C, L = y.shape
    y = jnp.max(y.reshape(B, C, L // 2, 2), axis=-1)

    flat = y.reshape(B, -1)                              # PyTorch x.view(B, -1)
    z = jnp.maximum(jnp.dot(flat, p['fc1_w'].T, precision=hp) + p['fc1_b'], 0.0)
    return jnp.dot(z, p['fc3_w'].T, precision=hp) + p['fc3_b']


def init_params(key):
    ks = jax.random.split(key, 16)

    def u(k, shape, fan_in):
        b = 1.0 / math.sqrt(fan_in)
        return jax.random.uniform(k, shape, jnp.float32, -b, b)

    p = {
        'conv1_w': u(ks[0], (8, 2, 3), 2 * 3),
        'conv1_b': u(ks[1], (8,), 2 * 3),
        'conv2_w': u(ks[2], (16, 8, 3), 8 * 3),
        'conv2_b': u(ks[3], (16,), 8 * 3),
        'fc1_w': u(ks[4], (120, 240), 240),
        'fc1_b': u(ks[5], (120,), 240),
        'fc3_w': u(ks[6], (1, 120), 120),
        'fc3_b': u(ks[7], (1,), 120),
        # BatchNorm params / running stats (eval-mode folding), deterministic.
        'bn1_g': 1.0 + 0.1 * jax.random.normal(ks[8], (8,), jnp.float32),
        'bn1_b': 0.1 * jax.random.normal(ks[9], (8,), jnp.float32),
        'bn1_m': 0.1 * jax.random.normal(ks[10], (8,), jnp.float32),
        'bn1_v': jax.random.uniform(ks[11], (8,), jnp.float32, 0.5, 1.5),
        'bn2_g': 1.0 + 0.1 * jax.random.normal(ks[12], (16,), jnp.float32),
        'bn2_b': 0.1 * jax.random.normal(ks[13], (16,), jnp.float32),
        'bn2_m': 0.1 * jax.random.normal(ks[14], (16,), jnp.float32),
        'bn2_v': jax.random.uniform(ks[15], (16,), jnp.float32, 0.5, 1.5),
    }
    return p


if __name__ == "__main__":
    B, CIN, L = 4, 2, 60                                 # fc1(240) => L = 60
    key = jax.random.PRNGKey(0)
    kp, kx = jax.random.split(key)
    params = init_params(kp)
    x = jax.random.normal(kx, (B, CIN, L), jnp.float32)  # PyTorch NCW input

    fwd = jax.jit(pairwise_cnn_forward)
    out = jax.block_until_ready(fwd(x, params))
    assert out.shape == (B, 1), out.shape

    ref = reference_forward(x, params)
    if not jnp.allclose(out, ref, rtol=5e-2, atol=2e-2):
        raise AssertionError(
            f"mismatch: max abs err = {float(jnp.max(jnp.abs(out - ref)))}")

    print("KERNEL_OK")
</pallas_src>

<mosaic_0001>
module attributes {stable_mosaic.version = 11 : i64} {
  func.func @kernel(%arg0: memref<242x6xf32, #tpu.memory_space<vmem>>, %arg1: memref<6x8xbf16, #tpu.memory_space<vmem>>, %arg2: memref<24x16xbf16, #tpu.memory_space<vmem>>, %arg3: memref<240x120xbf16, #tpu.memory_space<vmem>>, %arg4: memref<120x1xbf16, #tpu.memory_space<vmem>>, %arg5: memref<1x512xf32, #tpu.memory_space<vmem>>, %arg6: memref<4x1xf32, #tpu.memory_space<vmem>>, %arg7: memref<240x8xf32, #tpu.memory_space<vmem>>, %arg8: memref<136x8xf32, #tpu.memory_space<vmem>>, %arg9: memref<128x16xf32, #tpu.memory_space<vmem>>) attributes {dimension_semantics = [], scalar_prefetch = 0 : i64, scratch_operands = 3 : i64, tpu.core_type = #tpu.core_type<tc>} {
    %c0 = arith.constant 0 : index
    %c0_0 = arith.constant 0 : index
    %0 = vector.load %arg5[%c0, %c0_0] : memref<1x512xf32, #tpu.memory_space<vmem>>, vector<1x8xf32>
    %c0_1 = arith.constant 0 : index
    %c128 = arith.constant 128 : index
    %1 = vector.load %arg5[%c0_1, %c128] : memref<1x512xf32, #tpu.memory_space<vmem>>, vector<1x16xf32>
    %c0_2 = arith.constant 0 : index
    %c256 = arith.constant 256 : index
    %2 = vector.load %arg5[%c0_2, %c256] : memref<1x512xf32, #tpu.memory_space<vmem>>, vector<1x120xf32>
    %c0_3 = arith.constant 0 : index
    %c384 = arith.constant 384 : index
    %3 = vector.load %arg5[%c0_3, %c384] : memref<1x512xf32, #tpu.memory_space<vmem>>, vector<1x1xf32>
    %c1 = arith.constant 1 : index
    %c0_4 = arith.constant 0 : index
    %4 = vector.load %arg0[%c1, %c0_4] : memref<242x6xf32, #tpu.memory_space<vmem>>, vector<240x6xf32>
    %5 = vector.extract_strided_slice %4 {offsets = [0, 0], sizes = [240, 2], strides = [1, 1]} : vector<240x6xf32> to vector<240x2xf32>
    %c0_5 = arith.constant 0 : index
    %c0_6 = arith.constant 0 : index
    %6 = vector.load %arg0[%c0_5, %c0_6] : memref<242x6xf32, #tpu.memory_space<vmem>>, vector<240x2xf32>
    %7 = vector.extract_strided_slice %4 {offsets = [0, 2], sizes = [240, 1], strides = [1, 1]} : vector<240x6xf32> to vector<240x1xf32>
    %8 = vector.broadcast %7 : vector<240x1xf32> to vector<240x2xf32>
    %9 = arith.mulf %6, %8 : vector<240x2xf32>
    %c2 = arith.constant 2 : index
    %c0_7 = arith.constant 0 : index
    %10 = vector.load %arg0[%c2, %c0_7] : memref<242x6xf32, #tpu.memory_space<vmem>>, vector<240x2xf32>
    %11 = vector.extract_strided_slice %4 {offsets = [0, 3], sizes = [240, 1], strides = [1, 1]} : vector<240x6xf32> to vector<240x1xf32>
    %12 = vector.broadcast %11 : vector<240x1xf32> to vector<240x2xf32>
    %13 = arith.mulf %10, %12 : vector<240x2xf32>
    %14 = tpu.concatenate %9, %5, %13 in 1 : vector<240x2xf32>, vector<240x2xf32>, vector<240x2xf32> -> vector<240x6xf32>
    %15 = arith.truncf %14 : vector<240x6xf32> to vector<240x6xbf16>
    %c0_8 = arith.constant 0 : index
    %c0_9 = arith.constant 0 : index
    %16 = vector.load %arg1[%c0_8, %c0_9] : memref<6x8xbf16, #tpu.memory_space<vmem>>, vector<6x8xbf16>
    %cst = arith.constant dense<0.000000e+00> : vector<240x8xf32>
    %17 = tpu.matmul %15, %16, %cst {dimension_numbers = #tpu.dot_dimension_numbers<[1], [0], [0], [1], [0, 0, 1, 1], [], []>} : vector<240x6xbf16>, vector<6x8xbf16>, vector<240x8xf32> -> vector<240x8xf32>
    %18 = vector.broadcast %0 : vector<1x8xf32> to vector<240x8xf32>
    %19 = arith.addf %17, %18 : vector<240x8xf32>
    %cst_10 = arith.constant 0.000000e+00 : f32
    %20 = vector.broadcast %cst_10 : f32 to vector<240x8xf32>
    %21 = arith.maximumf %19, %20 : vector<240x8xf32>
    %c0_11 = arith.constant 0 : index
    %c0_12 = arith.constant 0 : index
    %22 = vector.load %arg7[%c0_11, %c0_12] : memref<240x8xf32, #tpu.memory_space<vmem>>, vector<240x8xf32>
    tpu.vector_store %arg7[%c0_11, %c0_12], %21 {strides = array<i32>} : memref<240x8xf32, #tpu.memory_space<vmem>>, vector<240x8xf32>,
    %c0_13 = arith.constant 0 : index
    %c0_14 = arith.constant 0 : index
    %23 = tpu.strided_load %arg7[%c0_13, %c0_14] {strides = array<i32: 2, 1>} : memref<240x8xf32, #tpu.memory_space<vmem>>, vector<120x8xf32>
    %c1_15 = arith.constant 1 : index
    %c0_16 = arith.constant 0 : index
    %24 = tpu.strided_load %arg7[%c1_15, %c0_16] {strides = array<i32: 2, 1>} : memref<240x8xf32, #tpu.memory_space<vmem>>, vector<120x8xf32>
    %25 = arith.maximumf %23, %24 : vector<120x8xf32>
    %cst_17 = arith.constant 0.000000e+00 : f32
    %26 = vector.broadcast %cst_17 : f32 to vector<136x8xf32>
    %c0_18 = arith.constant 0 : index
    %c0_19 = arith.constant 0 : index
    %27 = vector.load %arg8[%c0_18, %c0_19] : memref<136x8xf32, #tpu.memory_space<vmem>>, vector<136x8xf32>
    tpu.vector_store %arg8[%c0_18, %c0_19], %26 {strides = array<i32>} : memref<136x8xf32, #tpu.memory_space<vmem>>, vector<136x8xf32>,
    %c8 = arith.constant 8 : index
    %c0_20 = arith.constant 0 : index
    %28 = vector.load %arg8[%c8, %c0_20] : memref<136x8xf32, #tpu.memory_space<vmem>>, vector<120x8xf32>
    tpu.vector_store %arg8[%c8, %c0_20], %25 {strides = array<i32>} : memref<136x8xf32, #tpu.memory_space<vmem>>, vector<120x8xf32>,
    %c1_21 = arith.constant 1 : index
    %c4 = arith.constant 4 : index
    %29 = vector.load %arg0[%c1_21, %c4] : memref<242x6xf32, #tpu.memory_space<vmem>>, vector<120x2xf32>
    %c7 = arith.constant 7 : index
    %c0_22 = arith.constant 0 : index
    %30 = vector.load %arg8[%c7, %c0_22] : memref<136x8xf32, #tpu.memory_space<vmem>>, vector<120x8xf32>
    %31 = vector.extract_strided_slice %29 {offsets = [0, 0], sizes = [120, 1], strides = [1, 1]} : vector<120x2xf32> to vector<120x1xf32>
    %32 = vector.broadcast %31 : vector<120x1xf32> to vector<120x8xf32>
    %33 = arith.mulf %30, %32 : vector<120x8xf32>
    %c9 = arith.constant 9 : index
    %c0_23 = arith.constant 0 : index
    %34 = vector.load %arg8[%c9, %c0_23] : memref<136x8xf32, #tpu.memory_space<vmem>>, vector<120x8xf32>
    %35 = vector.extract_strided_slice %29 {offsets = [0, 1], sizes = [120, 1], strides = [1, 1]} : vector<120x2xf32> to vector<120x1xf32>
    %36 = vector.broadcast %35 : vector<120x1xf32> to vector<120x8xf32>
    %37 = arith.mulf %34, %36 : vector<120x8xf32>
    %38 = tpu.concatenate %33, %25, %37 in 1 : vector<120x8xf32>, vector<120x8xf32>, vector<120x8xf32> -> vector<120x24xf32>
    %39 = arith.truncf %38 : vector<120x24xf32> to vector<120x24xbf16>
    %c0_24 = arith.constant 0 : index
    %c0_25 = arith.constant 0 : index
    %40 = vector.load %arg2[%c0_24, %c0_25] : memref<24x16xbf16, #tpu.memory_space<vmem>>, vector<24x16xbf16>
    %cst_26 = arith.constant dense<0.000000e+00> : vector<120x16xf32>
    %41 = tpu.matmul %39, %40, %cst_26 {dimension_numbers = #tpu.dot_dimension_numbers<[1], [0], [0], [1], [0, 0, 1, 1], [], []>} : vector<120x24xbf16>, vector<24x16xbf16>, vector<120x16xf32> -> vector<120x16xf32>
    %42 = vector.broadcast %1 : vector<1x16xf32> to vector<120x16xf32>
    %43 = arith.addf %41, %42 : vector<120x16xf32>
    %cst_27 = arith.constant 0.000000e+00 : f32
    %44 = vector.broadcast %cst_27 : f32 to vector<120x16xf32>
    %45 = arith.maximumf %43, %44 : vector<120x16xf32>
    %cst_28 = arith.constant 0.000000e+00 : f32
    %46 = vector.broadcast %cst_28 : f32 to vector<128x16xf32>
    %c0_29 = arith.constant 0 : index
    %c0_30 = arith.constant 0 : index
    %47 = vector.load %arg9[%c0_29, %c0_30] : memref<128x16xf32, #tpu.memory_space<vmem>>, vector<128x16xf32>
    tpu.vector_store %arg9[%c0_29, %c0_30], %46 {strides = array<i32>} : memref<128x16xf32, #tpu.memory_space<vmem>>, vector<128x16xf32>,
    %c0_31 = arith.constant 0 : index
    %c0_32 = arith.constant 0 : index
    %48 = vector.load %arg9[%c0_31, %c0_32] : memref<128x16xf32, #tpu.memory_space<vmem>>, vector<120x16xf32>
    tpu.vector_store %arg9[%c0_31, %c0_32], %45 {strides = array<i32>} : memref<128x16xf32, #tpu.memory_space<vmem>>, vector<120x16xf32>,
    %c1_33 = arith.constant 1 : index
    %c0_34 = arith.constant 0 : index
    %49 = vector.load %arg9[%c1_33, %c0_34] : memref<128x16xf32, #tpu.memory_space<vmem>>, vector<120x16xf32>
    %50 = arith.maximumf %45, %49 : vector<120x16xf32>
    %c0_35 = arith.constant 0 : index
    %c0_36 = arith.constant 0 : index
    %51 = vector.load %arg9[%c0_35, %c0_36] : memref<128x16xf32, #tpu.memory_space<vmem>>, vector<120x16xf32>
    tpu.vector_store %arg9[%c0_35, %c0_36], %50 {strides = array<i32>} : memref<128x16xf32, #tpu.memory_space<vmem>>, vector<120x16xf32>,
    %c0_37 = arith.constant 0 : index
    %c0_38 = arith.constant 0 : index
    %52 = tpu.strided_load %arg9[%c0_37, %c0_38] {strides = array<i32: 30, 1>} : memref<128x16xf32, #tpu.memory_space<vmem>>, vector<4x16xf32>
    %c2_39 = arith.constant 2 : index
    %c0_40 = arith.constant 0 : index
    %53 = tpu.strided_load %arg9[%c2_39, %c0_40] {strides = array<i32: 30, 1>} : memref<128x16xf32, #tpu.memory_space<vmem>>, vector<4x16xf32>
    %c4_41 = arith.constant 4 : index
    %c0_42 = arith.constant 0 : index
    %54 = tpu.strided_load %arg9[%c4_41, %c0_42] {strides = array<i32: 30, 1>} : memref<128x16xf32, #tpu.memory_space<vmem>>, vector<4x16xf32>
    %c6 = arith.constant 6 : index
    %c0_43 = arith.constant 0 : index
    %55 = tpu.strided_load %arg9[%c6, %c0_43] {strides = array<i32: 30, 1>} : memref<128x16xf32, #tpu.memory_space<vmem>>, vector<4x16xf32>
    %c8_44 = arith.constant 8 : index
    %c0_45 = arith.constant 0 : index
    %56 = tpu.strided_load %arg9[%c8_44, %c0_45] {strides = array<i32: 30, 1>} : memref<128x16xf32, #tpu.memory_space<vmem>>, vector<4x16xf32>
    %c10 = arith.constant 10 : index
    %c0_46 = arith.constant 0 : index
    %57 = tpu.strided_load %arg9[%c10, %c0_46] {strides = array<i32: 30, 1>} : memref<128x16xf32, #tpu.memory_space<vmem>>, vector<4x16xf32>
    %c12 = arith.constant 12 : index
    %c0_47 = arith.constant 0 : index
    %58 = tpu.strided_load %arg9[%c12, %c0_47] {strides = array<i32: 30, 1>} : memref<128x16xf32, #tpu.memory_space<vmem>>, vector<4x16xf32>
    %c14 = arith.constant 14 : index
    %c0_48 = arith.constant 0 : index
    %59 = tpu.strided_load %arg9[%c14, %c0_48] {strides = array<i32: 30, 1>} : memref<128x16xf32, #tpu.memory_space<vmem>>, vector<4x16xf32>
    %c16 = arith.constant 16 : index
    %c0_49 = arith.constant 0 : index
    %60 = tpu.strided_load %arg9[%c16, %c0_49] {strides = array<i32: 30, 1>} : memref<128x16xf32, #tpu.memory_space<vmem>>, vector<4x16xf32>
    %c18 = arith.constant 18 : index
    %c0_50 = arith.constant 0 : index
    %61 = tpu.strided_load %arg9[%c18, %c0_50] {strides = array<i32: 30, 1>} : memref<128x16xf32, #tpu.memory_space<vmem>>, vector<4x16xf32>
    %c20 = arith.constant 20 : index
    %c0_51 = arith.constant 0 : index
    %62 = tpu.strided_load %arg9[%c20, %c0_51] {strides = array<i32: 30, 1>} : memref<128x16xf32, #tpu.memory_space<vmem>>, vector<4x16xf32>
    %c22 = arith.constant 22 : index
    %c0_52 = arith.constant 0 : index
    %63 = tpu.strided_load %arg9[%c22, %c0_52] {strides = array<i32: 30, 1>} : memref<128x16xf32, #tpu.memory_space<vmem>>, vector<4x16xf32>
    %c24 = arith.constant 24 : index
    %c0_53 = arith.constant 0 : index
    %64 = tpu.strided_load %arg9[%c24, %c0_53] {strides = array<i32: 30, 1>} : memref<128x16xf32, #tpu.memory_space<vmem>>, vector<4x16xf32>
    %c26 = arith.constant 26 : index
    %c0_54 = arith.constant 0 : index
    %65 = tpu.strided_load %arg9[%c26, %c0_54] {strides = array<i32: 30, 1>} : memref<128x16xf32, #tpu.memory_space<vmem>>, vector<4x16xf32>
    %c28 = arith.constant 28 : index
    %c0_55 = arith.constant 0 : index
    %66 = tpu.strided_load %arg9[%c28, %c0_55] {strides = array<i32: 30, 1>} : memref<128x16xf32, #tpu.memory_space<vmem>>, vector<4x16xf32>
    %67 = tpu.concatenate %52, %53, %54, %55, %56, %57, %58, %59, %60, %61, %62, %63, %64, %65, %66 in 1 : vector<4x16xf32>, vector<4x16xf32>, vector<4x16xf32>, vector<4x16xf32>, vector<4x16xf32>, vector<4x16xf32>, vector<4x16xf32>, vector<4x16xf32>, vector<4x16xf32>, vector<4x16xf32>, vector<4x16xf32>, vector<4x16xf32>, vector<4x16xf32>, vector<4x16xf32>, vector<4x16xf32> -> vector<4x240xf32>
    %68 = arith.truncf %67 : vector<4x240xf32> to vector<4x240xbf16>
    %c0_56 = arith.constant 0 : index
    %c0_57 = arith.constant 0 : index
    %69 = vector.load %arg3[%c0_56, %c0_57] : memref<240x120xbf16, #tpu.memory_space<vmem>>, vector<240x120xbf16>
    %cst_58 = arith.constant dense<0.000000e+00> : vector<4x120xf32>
    %70 = tpu.matmul %68, %69, %cst_58 {dimension_numbers = #tpu.dot_dimension_numbers<[1], [0], [0], [1], [0, 0, 1, 1], [], []>} : vector<4x240xbf16>, vector<240x120xbf16>, vector<4x120xf32> -> vector<4x120xf32>
    %71 = vector.broadcast %2 : vector<1x120xf32> to vector<4x120xf32>
    %72 = arith.addf %70, %71 : vector<4x120xf32>
    %cst_59 = arith.constant 0.000000e+00 : f32
    %73 = vector.broadcast %cst_59 : f32 to vector<4x120xf32>
    %74 = arith.maximumf %72, %73 : vector<4x120xf32>
    %75 = arith.truncf %74 : vector<4x120xf32> to vector<4x120xbf16>
    %c0_60 = arith.constant 0 : index
    %c0_61 = arith.constant 0 : index
    %76 = vector.load %arg4[%c0_60, %c0_61] : memref<120x1xbf16, #tpu.memory_space<vmem>>, vector<120x1xbf16>
    %cst_62 = arith.constant dense<0.000000e+00> : vector<4x1xf32>
    %77 = tpu.matmul %75, %76, %cst_62 {dimension_numbers = #tpu.dot_dimension_numbers<[1], [0], [0], [1], [0, 0, 1, 1], [], []>} : vector<4x120xbf16>, vector<120x1xbf16>, vector<4x1xf32> -> vector<4x1xf32>
    %78 = vector.broadcast %3 : vector<1x1xf32> to vector<4x1xf32>
    %79 = arith.addf %77, %78 : vector<4x1xf32>
    %c0_63 = arith.constant 0 : index
    %c0_64 = arith.constant 0 : index
    %80 = vector.load %arg6[%c0_63, %c0_64] : memref<4x1xf32, #tpu.memory_space<vmem>>, vector<4x1xf32>
    tpu.vector_store %arg6[%c0_63, %c0_64], %79 {strides = array<i32>} : memref<4x1xf32, #tpu.memory_space<vmem>>, vector<4x1xf32>,
    return
  }
}

</mosaic_0001>

<llo_original>
// kernel: pairwise_cnn_forward.1
$region0: #{pairwise_cnn_forward.1}
  #allocation0 [shape = 'u32[]', space=smem, size = 0x4, offset = 0x4, fixed_abs, tag = 'smem constant byte address 0x4 - core index']
  #allocation1 [shape = 'u32[144,128]{1,0:T(1,128)}', space=vmem, size = 0x12000, scoped, tag = 'internal scratch']
  #allocation2 [shape = 'f32[240,8]{1,0:T(8,128)}', space=vmem, size = 0x1e000, scoped, tag = 'scratch operand']
  #allocation3 [shape = 'f32[136,8]{1,0:T(8,128)}', space=vmem, size = 0x11000, scoped, tag = 'scratch operand']
  #allocation4 [shape = 'f32[128,16]{1,0:T(8,128)}', space=vmem, size = 0x10000, scoped, tag = 'scratch operand']
  %s0 = inlined_call_operand.vmem [shape: f32[242,6], index: 0, kind: input, shape index: {}]
  %s1 = inlined_call_operand.vmem [shape: bf16[6,8], index: 1, kind: input, shape index: {}]
  %s2 = inlined_call_operand.vmem [shape: bf16[24,16], index: 2, kind: input, shape index: {}]
  %s3 = inlined_call_operand.vmem [shape: bf16[240,120], index: 3, kind: input, shape index: {}]
  %s4 = inlined_call_operand.vmem [shape: bf16[120,1], index: 4, kind: input, shape index: {}]
  %s5 = inlined_call_operand.vmem [shape: f32[1,512], index: 5, kind: input, shape index: {}]
  %s6 = inlined_call_operand.vmem [shape: f32[4,1], index: 6, kind: output, shape index: {}]
  %s7 = sld [smem:[#allocation0]]
  $region34: #{pairwise_cnn_forward.1} parent=0
    _
  %s9 = ssub.s32 1, %s7
  %s10 = scalar_select 0, %s9, %s7
  // Predicated region
  $region2: #{pairwise_cnn_forward.1} parent=0 // pred_check
    _
  $region3: #{pairwise_cnn_forward.1} parent=0 // pred_check_branch
    %12 = sbr.rel (0) target = $region5
  $region4: #{pairwise_cnn_forward.1} parent=0 // pred_region
    _
  $region5: #{pairwise_cnn_forward.1} parent=0 // pred_fallthru
    _
  // Predicated region
  $region6: #{pairwise_cnn_forward.1} parent=0 // pred_check
    _
  $region7: #{pairwise_cnn_forward.1} parent=0 // pred_check_branch
    %14 = sbr.rel (0) target = $region9
  $region8: #{pairwise_cnn_forward.1} parent=0 // pred_region
    _
  $region9: #{pairwise_cnn_forward.1} parent=0 // pred_fallthru
    _
  // Predicated region
  $region10: #{pairwise_cnn_forward.1} parent=0 // pred_check
    _
  $region11: #{pairwise_cnn_forward.1} parent=0 // pred_check_branch
    %16 = sbr.rel (0) target = $region13
  $region12: #{pairwise_cnn_forward.1} parent=0 // pred_region
    _
  $region13: #{pairwise_cnn_forward.1} parent=0 // pred_fallthru
    _
  // Predicated region
  $region14: #{pairwise_cnn_forward.1} parent=0 // pred_check
    _
  $region15: #{pairwise_cnn_forward.1} parent=0 // pred_check_branch
    %18 = sbr.rel (0) target = $region17
  $region16: #{pairwise_cnn_forward.1} parent=0 // pred_region
    _
  $region17: #{pairwise_cnn_forward.1} parent=0 // pred_fallthru
    _
  // Predicated region
  $region18: #{pairwise_cnn_forward.1} parent=0 // pred_check
    _
  $region19: #{pairwise_cnn_forward.1} parent=0 // pred_check_branch
    %20 = sbr.rel (0) target = $region21
  $region20: #{pairwise_cnn_forward.1} parent=0 // pred_region
    _
  $region21: #{pairwise_cnn_forward.1} parent=0 // pred_fallthru
    _
  // Predicated region
  $region22: #{pairwise_cnn_forward.1} parent=0 // pred_check
    _
  $region23: #{pairwise_cnn_forward.1} parent=0 // pred_check_branch
    %22 = sbr.rel (0) target = $region25
  $region24: #{pairwise_cnn_forward.1} parent=0 // pred_region
    _
  $region25: #{pairwise_cnn_forward.1} parent=0 // pred_fallthru
    _
  %v24 = vld [vmem:[%s5] sm:$0x1]
  %v25 = vld [vmem:[%s5 + $0x1] sm:$0x1]
  %v26 = vld [vmem:[%s5 + $0x2] sm:$0x1]
  %v27 = vld [vmem:[%s5 + $0x3] sm:$0x1]
  %v28 = vld [vmem:[%s0 + $0x1] sm:$0xff]
  %v29 = vld [vmem:[%s0 + $0x9] sm:$0xff]
  %v30 = vld [vmem:[%s0 + $0x11] sm:$0xff]
  %v31 = vld [vmem:[%s0 + $0x19] sm:$0xff]
  %v32 = vld [vmem:[%s0 + $0x21] sm:$0xff]
  %v33 = vld [vmem:[%s0 + $0x29] sm:$0xff]
  %v34 = vld [vmem:[%s0 + $0x31] sm:$0xff]
  %v35 = vld [vmem:[%s0 + $0x39] sm:$0xff]
  %v36 = vld [vmem:[%s0 + $0x41] sm:$0xff]
  %v37 = vld [vmem:[%s0 + $0x49] sm:$0xff]
  %v38 = vld [vmem:[%s0 + $0x51] sm:$0xff]
  %v39 = vld [vmem:[%s0 + $0x59] sm:$0xff]
  %v40 = vld [vmem:[%s0 + $0x61] sm:$0xff]
  %v41 = vld [vmem:[%s0 + $0x69] sm:$0xff]
  %v42 = vld [vmem:[%s0 + $0x71] sm:$0xff]
  %v43 = vld [vmem:[%s0 + $0x79] sm:$0xff]
  %v44 = vld [vmem:[%s0 + $0x81] sm:$0xff]
  %v45 = vld [vmem:[%s0 + $0x89] sm:$0xff]
  %v46 = vld [vmem:[%s0 + $0x91] sm:$0xff]
  %v47 = vld [vmem:[%s0 + $0x99] sm:$0xff]
  %v48 = vld [vmem:[%s0 + $0xa1] sm:$0xff]
  %v49 = vld [vmem:[%s0 + $0xa9] sm:$0xff]
  %v50 = vld [vmem:[%s0 + $0xb1] sm:$0xff]
  %v51 = vld [vmem:[%s0 + $0xb9] sm:$0xff]
  %v52 = vld [vmem:[%s0 + $0xc1] sm:$0xff]
  %v53 = vld [vmem:[%s0 + $0xc9] sm:$0xff]
  %v54 = vld [vmem:[%s0 + $0xd1] sm:$0xff]
  %v55 = vld [vmem:[%s0 + $0xd9] sm:$0xff]
  %v56 = vld [vmem:[%s0 + $0xe1] sm:$0xff]
  %v57 = vld [vmem:[%s0 + $0xe9] sm:$0xff]
  %v58 = vld [vmem:[%s0] sm:$0xff]
  %v59 = vld [vmem:[%s0 + $0x8] sm:$0xff]
  %v60 = vld [vmem:[%s0 + $0x10] sm:$0xff]
  %v61 = vld [vmem:[%s0 + $0x18] sm:$0xff]
  %v62 = vld [vmem:[%s0 + $0x20] sm:$0xff]
  %v63 = vld [vmem:[%s0 + $0x28] sm:$0xff]
  %v64 = vld [vmem:[%s0 + $0x30] sm:$0xff]
  %v65 = vld [vmem:[%s0 + $0x38] sm:$0xff]
  %v66 = vld [vmem:[%s0 + $0x40] sm:$0xff]
  %v67 = vld [vmem:[%s0 + $0x48] sm:$0xff]
  %v68 = vld [vmem:[%s0 + $0x50] sm:$0xff]
  %v69 = vld [vmem:[%s0 + $0x58] sm:$0xff]
  %v70 = vld [vmem:[%s0 + $0x60] sm:$0xff]
  %v71 = vld [vmem:[%s0 + $0x68] sm:$0xff]
  %v72 = vld [vmem:[%s0 + $0x70] sm:$0xff]
  %v73 = vld [vmem:[%s0 + $0x78] sm:$0xff]
  %v74 = vld [vmem:[%s0 + $0x80] sm:$0xff]
  %v75 = vld [vmem:[%s0 + $0x88] sm:$0xff]
  %v76 = vld [vmem:[%s0 + $0x90] sm:$0xff]
  %v77 = vld [vmem:[%s0 + $0x98] sm:$0xff]
  %v78 = vld [vmem:[%s0 + $0xa0] sm:$0xff]
  %v79 = vld [vmem:[%s0 + $0xa8] sm:$0xff]
  %v80 = vld [vmem:[%s0 + $0xb0] sm:$0xff]
  %v81 = vld [vmem:[%s0 + $0xb8] sm:$0xff]
  %v82 = vld [vmem:[%s0 + $0xc0] sm:$0xff]
  %v83 = vld [vmem:[%s0 + $0xc8] sm:$0xff]
  %v84 = vld [vmem:[%s0 + $0xd0] sm:$0xff]
  %v85 = vld [vmem:[%s0 + $0xd8] sm:$0xff]
  %v86 = vld [vmem:[%s0 + $0xe0] sm:$0xff]
  %v87 = vld [vmem:[%s0 + $0xe8] sm:$0xff]
  %89 = vset.pattern.permute.xlu0 2
  %90 = vperm.xlu0 %89, %v28
  %v91 = vpop.permute.xlu0 %90
  %94 = vset.pattern.permute.xlu0 2
  %95 = vperm.xlu0 %94, %v29
  %v96 = vpop.permute.xlu0 %95
  %99 = vset.pattern.permute.xlu0 2
  %100 = vperm.xlu0 %99, %v30
  %v101 = vpop.permute.xlu0 %100
  %104 = vset.pattern.permute.xlu0 2
  %105 = vperm.xlu0 %104, %v31
  %v106 = vpop.permute.xlu0 %105
  %109 = vset.pattern.permute.xlu0 2
  %110 = vperm.xlu0 %109, %v32
  %v111 = vpop.permute.xlu0 %110
  %114 = vset.pattern.permute.xlu0 2
  %115 = vperm.xlu0 %114, %v33
  %v116 = vpop.permute.xlu0 %115
  %119 = vset.pattern.permute.xlu0 2
  %120 = vperm.xlu0 %119, %v34
  %v121 = vpop.permute.xlu0 %120
  %124 = vset.pattern.permute.xlu0 2
  %125 = vperm.xlu0 %124, %v35
  %v126 = vpop.permute.xlu0 %125
  %129 = vset.pattern.permute.xlu0 2
  %130 = vperm.xlu0 %129, %v36
  %v131 = vpop.permute.xlu0 %130
  %134 = vset.pattern.permute.xlu0 2
  %135 = vperm.xlu0 %134, %v37
  %v136 = vpop.permute.xlu0 %135
  %139 = vset.pattern.permute.xlu0 2
  %140 = vperm.xlu0 %139, %v38
  %v141 = vpop.permute.xlu0 %140
  %144 = vset.pattern.permute.xlu0 2
  %145 = vperm.xlu0 %144, %v39
  %v146 = vpop.permute.xlu0 %145
  %149 = vset.pattern.permute.xlu0 2
  %150 = vperm.xlu0 %149, %v40
  %v151 = vpop.permute.xlu0 %150
  %154 = vset.pattern.permute.xlu0 2
  %155 = vperm.xlu0 %154, %v41
  %v156 = vpop.permute.xlu0 %155
  %159 = vset.pattern.permute.xlu0 2
  %160 = vperm.xlu0 %159, %v42
  %v161 = vpop.permute.xlu0 %160
  %164 = vset.pattern.permute.xlu0 2
  %165 = vperm.xlu0 %164, %v43
  %v166 = vpop.permute.xlu0 %165
  %169 = vset.pattern.permute.xlu0 2
  %170 = vperm.xlu0 %169, %v44
  %v171 = vpop.permute.xlu0 %170
  %174 = vset.pattern.permute.xlu0 2
  %175 = vperm.xlu0 %174, %v45
  %v176 = vpop.permute.xlu0 %175
  %179 = vset.pattern.permute.xlu0 2
  %180 = vperm.xlu0 %179, %v46
  %v181 = vpop.permute.xlu0 %180
  %184 = vset.pattern.permute.xlu0 2
  %185 = vperm.xlu0 %184, %v47
  %v186 = vpop.permute.xlu0 %185
  %189 = vset.pattern.permute.xlu0 2
  %190 = vperm.xlu0 %189, %v48
  %v191 = vpop.permute.xlu0 %190
  %194 = vset.pattern.permute.xlu0 2
  %195 = vperm.xlu0 %194, %v49
  %v196 = vpop.permute.xlu0 %195
  %199 = vset.pattern.permute.xlu0 2
  %200 = vperm.xlu0 %199, %v50
  %v201 = vpop.permute.xlu0 %200
  %204 = vset.pattern.permute.xlu0 2
  %205 = vperm.xlu0 %204, %v51
  %v206 = vpop.permute.xlu0 %205
  %209 = vset.pattern.permute.xlu0 2
  %210 = vperm.xlu0 %209, %v52
  %v211 = vpop.permute.xlu0 %210
  %214 = vset.pattern.permute.xlu0 2
  %215 = vperm.xlu0 %214, %v53
  %v216 = vpop.permute.xlu0 %215
  %219 = vset.pattern.permute.xlu0 2
  %220 = vperm.xlu0 %219, %v54
  %v221 = vpop.permute.xlu0 %220
  %224 = vset.pattern.permute.xlu0 2
  %225 = vperm.xlu0 %224, %v55
  %v226 = vpop.permute.xlu0 %225
  %229 = vset.pattern.permute.xlu0 2
  %230 = vperm.xlu0 %229, %v56
  %v231 = vpop.permute.xlu0 %230
  %234 = vset.pattern.permute.xlu0 2
  %235 = vperm.xlu0 %234, %v57
  %v236 = vpop.permute.xlu0 %235
  %v238 = vmul.f32 %v58, %v91
  %v239 = vmul.f32 %v59, %v96
  %v240 = vmul.f32 %v60, %v101
  %v241 = vmul.f32 %v61, %v106
  %v242 = vmul.f32 %v62, %v111
  %v243 = vmul.f32 %v63, %v116
  %v244 = vmul.f32 %v64, %v121
  %v245 = vmul.f32 %v65, %v126
  %v246 = vmul.f32 %v66, %v131
  %v247 = vmul.f32 %v67, %v136
  %v248 = vmul.f32 %v68, %v141
  %v249 = vmul.f32 %v69, %v146
  %v250 = vmul.f32 %v70, %v151
  %v251 = vmul.f32 %v71, %v156
  %v252 = vmul.f32 %v72, %v161
  %v253 = vmul.f32 %v73, %v166
  %v254 = vmul.f32 %v74, %v171
  %v255 = vmul.f32 %v75, %v176
  %v256 = vmul.f32 %v76, %v181
  %v257 = vmul.f32 %v77, %v186
  %v258 = vmul.f32 %v78, %v191
  %v259 = vmul.f32 %v79, %v196
  %v260 = vmul.f32 %v80, %v201
  %v261 = vmul.f32 %v81, %v206
  %v262 = vmul.f32 %v82, %v211
  %v263 = vmul.f32 %v83, %v216
  %v264 = vmul.f32 %v84, %v221
  %v265 = vmul.f32 %v85, %v226
  %v266 = vmul.f32 %v86, %v231
  %v267 = vmul.f32 %v87, %v236
  %v268 = vld [vmem:[%s0 + $0x2] sm:$0xff]
  %v269 = vld [vmem:[%s0 + $0xa] sm:$0xff]
  %v270 = vld [vmem:[%s0 + $0x12] sm:$0xff]
  %v271 = vld [vmem:[%s0 + $0x1a] sm:$0xff]
  %v272 = vld [vmem:[%s0 + $0x22] sm:$0xff]
  %v273 = vld [vmem:[%s0 + $0x2a] sm:$0xff]
  %v274 = vld [vmem:[%s0 + $0x32] sm:$0xff]
  %v275 = vld [vmem:[%s0 + $0x3a] sm:$0xff]
  %v276 = vld [vmem:[%s0 + $0x42] sm:$0xff]
  %v277 = vld [vmem:[%s0 + $0x4a] sm:$0xff]
  %v278 = vld [vmem:[%s0 + $0x52] sm:$0xff]
  %v279 = vld [vmem:[%s0 + $0x5a] sm:$0xff]
  %v280 = vld [vmem:[%s0 + $0x62] sm:$0xff]
  %v281 = vld [vmem:[%s0 + $0x6a] sm:$0xff]
  %v282 = vld [vmem:[%s0 + $0x72] sm:$0xff]
  %v283 = vld [vmem:[%s0 + $0x7a] sm:$0xff]
  %v284 = vld [vmem:[%s0 + $0x82] sm:$0xff]
  %v285 = vld [vmem:[%s0 + $0x8a] sm:$0xff]
  %v286 = vld [vmem:[%s0 + $0x92] sm:$0xff]
  %v287 = vld [vmem:[%s0 + $0x9a] sm:$0xff]
  %v288 = vld [vmem:[%s0 + $0xa2] sm:$0xff]
  %v289 = vld [vmem:[%s0 + $0xaa] sm:$0xff]
  %v290 = vld [vmem:[%s0 + $0xb2] sm:$0xff]
  %v291 = vld [vmem:[%s0 + $0xba] sm:$0xff]
  %v292 = vld [vmem:[%s0 + $0xc2] sm:$0xff]
  %v293 = vld [vmem:[%s0 + $0xca] sm:$0xff]
  %v294 = vld [vmem:[%s0 + $0xd2] sm:$0xff]
  %v295 = vld [vmem:[%s0 + $0xda] sm:$0xff]
  %v296 = vld [vmem:[%s0 + $0xe2] sm:$0xff]
  %v297 = vld [vmem:[%s0 + $0xea] sm:$0xff]
  %298 = vset.pattern.permute.xlu0 3
  %299 = vperm.xlu0 %298, %v28
  %v300 = vpop.permute.xlu0 %299
  %302 = vset.pattern.permute.xlu0 3
  %303 = vperm.xlu0 %302, %v29
  %v304 = vpop.permute.xlu0 %303
  %306 = vset.pattern.permute.xlu0 3
  %307 = vperm.xlu0 %306, %v30
  %v308 = vpop.permute.xlu0 %307
  %310 = vset.pattern.permute.xlu0 3
  %311 = vperm.xlu0 %310, %v31
  %v312 = vpop.permute.xlu0 %311
  %314 = vset.pattern.permute.xlu0 3
  %315 = vperm.xlu0 %314, %v32
  %v316 = vpop.permute.xlu0 %315
  %318 = vset.pattern.permute.xlu0 3
  %319 = vperm.xlu0 %318, %v33
  %v320 = vpop.permute.xlu0 %319
  %322 = vset.pattern.permute.xlu0 3
  %323 = vperm.xlu0 %322, %v34
  %v324 = vpop.permute.xlu0 %323
  %326 = vset.pattern.permute.xlu0 3
  %327 = vperm.xlu0 %326, %v35
  %v328 = vpop.permute.xlu0 %327
  %330 = vset.pattern.permute.xlu0 3
  %331 = vperm.xlu0 %330, %v36
  %v332 = vpop.permute.xlu0 %331
  %334 = vset.pattern.permute.xlu0 3
  %335 = vperm.xlu0 %334, %v37
  %v336 = vpop.permute.xlu0 %335
  %338 = vset.pattern.permute.xlu0 3
  %339 = vperm.xlu0 %338, %v38
  %v340 = vpop.permute.xlu0 %339
  %342 = vset.pattern.permute.xlu0 3
  %343 = vperm.xlu0 %342, %v39
  %v344 = vpop.permute.xlu0 %343
  %346 = vset.pattern.permute.xlu0 3
  %347 = vperm.xlu0 %346, %v40
  %v348 = vpop.permute.xlu0 %347
  %350 = vset.pattern.permute.xlu0 3
  %351 = vperm.xlu0 %350, %v41
  %v352 = vpop.permute.xlu0 %351
  %354 = vset.pattern.permute.xlu0 3
  %355 = vperm.xlu0 %354, %v42
  %v356 = vpop.permute.xlu0 %355
  %358 = vset.pattern.permute.xlu0 3
  %359 = vperm.xlu0 %358, %v43
  %v360 = vpop.permute.xlu0 %359
  %362 = vset.pattern.permute.xlu0 3
  %363 = vperm.xlu0 %362, %v44
  %v364 = vpop.permute.xlu0 %363
  %366 = vset.pattern.permute.xlu0 3
  %367 = vperm.xlu0 %366, %v45
  %v368 = vpop.permute.xlu0 %367
  %370 = vset.pattern.permute.xlu0 3
  %371 = vperm.xlu0 %370, %v46
  %v372 = vpop.permute.xlu0 %371
  %374 = vset.pattern.permute.xlu0 3
  %375 = vperm.xlu0 %374, %v47
  %v376 = vpop.permute.xlu0 %375
  %378 = vset.pattern.permute.xlu0 3
  %379 = vperm.xlu0 %378, %v48
  %v380 = vpop.permute.xlu0 %379
  %382 = vset.pattern.permute.xlu0 3
  %383 = vperm.xlu0 %382, %v49
  %v384 = vpop.permute.xlu0 %383
  %386 = vset.pattern.permute.xlu0 3
  %387 = vperm.xlu0 %386, %v50
  %v388 = vpop.permute.xlu0 %387
  %390 = vset.pattern.permute.xlu0 3
  %391 = vperm.xlu0 %390, %v51
  %v392 = vpop.permute.xlu0 %391
  %394 = vset.pattern.permute.xlu0 3
  %395 = vperm.xlu0 %394, %v52
  %v396 = vpop.permute.xlu0 %395
  %398 = vset.pattern.permute.xlu0 3
  %399 = vperm.xlu0 %398, %v53
  %v400 = vpop.permute.xlu0 %399
  %402 = vset.pattern.permute.xlu0 3
  %403 = vperm.xlu0 %402, %v54
  %v404 = vpop.permute.xlu0 %403
  %406 = vset.pattern.permute.xlu0 3
  %407 = vperm.xlu0 %406, %v55
  %v408 = vpop.permute.xlu0 %407
  %410 = vset.pattern.permute.xlu0 3
  %411 = vperm.xlu0 %410, %v56
  %v412 = vpop.permute.xlu0 %411
  %414 = vset.pattern.permute.xlu0 3
  %415 = vperm.xlu0 %414, %v57
  %v416 = vpop.permute.xlu0 %415
  %v418 = vmul.f32 %v268, %v300
  %v419 = vmul.f32 %v269, %v304
  %v420 = vmul.f32 %v270, %v308
  %v421 = vmul.f32 %v271, %v312
  %v422 = vmul.f32 %v272, %v316
  %v423 = vmul.f32 %v273, %v320
  %v424 = vmul.f32 %v274, %v324
  %v425 = vmul.f32 %v275, %v328
  %v426 = vmul.f32 %v276, %v332
  %v427 = vmul.f32 %v277, %v336
  %v428 = vmul.f32 %v278, %v340
  %v429 = vmul.f32 %v279, %v344
  %v430 = vmul.f32 %v280, %v348
  %v431 = vmul.f32 %v281, %v352
  %v432 = vmul.f32 %v282, %v356
  %v433 = vmul.f32 %v283, %v360
  %v434 = vmul.f32 %v284, %v364
  %v435 = vmul.f32 %v285, %v368
  %v436 = vmul.f32 %v286, %v372
  %v437 = vmul.f32 %v287, %v376
  %v438 = vmul.f32 %v288, %v380
  %v439 = vmul.f32 %v289, %v384
  %v440 = vmul.f32 %v290, %v388
  %v441 = vmul.f32 %v291, %v392
  %v442 = vmul.f32 %v292, %v396
  %v443 = vmul.f32 %v293, %v400
  %v444 = vmul.f32 %v294, %v404
  %v445 = vmul.f32 %v295, %v408
  %v446 = vmul.f32 %v296, %v412
  %v447 = vmul.f32 %v297, %v416
  %448 = vrot.lane.b32.xlu0 %v28, 2
  %v449 = vpop.permute.xlu0 %448
  %450 = vrot.lane.b32.xlu0 %v29, 2
  %v451 = vpop.permute.xlu0 %450
  %452 = vrot.lane.b32.xlu0 %v30, 2
  %v453 = vpop.permute.xlu0 %452
  %454 = vrot.lane.b32.xlu0 %v31, 2
  %v455 = vpop.permute.xlu0 %454
  %456 = vrot.lane.b32.xlu0 %v32, 2
  %v457 = vpop.permute.xlu0 %456
  %458 = vrot.lane.b32.xlu0 %v33, 2
  %v459 = vpop.permute.xlu0 %458
  %460 = vrot.lane.b32.xlu0 %v34, 2
  %v461 = vpop.permute.xlu0 %460
  %462 = vrot.lane.b32.xlu0 %v35, 2
  %v463 = vpop.permute.xlu0 %462
  %464 = vrot.lane.b32.xlu0 %v36, 2
  %v465 = vpop.permute.xlu0 %464
  %466 = vrot.lane.b32.xlu0 %v37, 2
  %v467 = vpop.permute.xlu0 %466
  %468 = vrot.lane.b32.xlu0 %v38, 2
  %v469 = vpop.permute.xlu0 %468
  %470 = vrot.lane.b32.xlu0 %v39, 2
  %v471 = vpop.permute.xlu0 %470
  %472 = vrot.lane.b32.xlu0 %v40, 2
  %v473 = vpop.permute.xlu0 %472
  %474 = vrot.lane.b32.xlu0 %v41, 2
  %v475 = vpop.permute.xlu0 %474
  %476 = vrot.lane.b32.xlu0 %v42, 2
  %v477 = vpop.permute.xlu0 %476
  %478 = vrot.lane.b32.xlu0 %v43, 2
  %v479 = vpop.permute.xlu0 %478
  %480 = vrot.lane.b32.xlu0 %v44, 2
  %v481 = vpop.permute.xlu0 %480
  %482 = vrot.lane.b32.xlu0 %v45, 2
  %v483 = vpop.permute.xlu0 %482
  %484 = vrot.lane.b32.xlu0 %v46, 2
  %v485 = vpop.permute.xlu0 %484
  %486 = vrot.lane.b32.xlu0 %v47, 2
  %v487 = vpop.permute.xlu0 %486
  %488 = vrot.lane.b32.xlu0 %v48, 2
  %v489 = vpop.permute.xlu0 %488
  %490 = vrot.lane.b32.xlu0 %v49, 2
  %v491 = vpop.permute.xlu0 %490
  %492 = vrot.lane.b32.xlu0 %v50, 2
  %v493 = vpop.permute.xlu0 %492
  %494 = vrot.lane.b32.xlu0 %v51, 2
  %v495 = vpop.permute.xlu0 %494
  %496 = vrot.lane.b32.xlu0 %v52, 2
  %v497 = vpop.permute.xlu0 %496
  %498 = vrot.lane.b32.xlu0 %v53, 2
  %v499 = vpop.permute.xlu0 %498
  %500 = vrot.lane.b32.xlu0 %v54, 2
  %v501 = vpop.permute.xlu0 %500
  %502 = vrot.lane.b32.xlu0 %v55, 2
  %v503 = vpop.permute.xlu0 %502
  %504 = vrot.lane.b32.xlu0 %v56, 2
  %v505 = vpop.permute.xlu0 %504
  %506 = vrot.lane.b32.xlu0 %v57, 2
  %v507 = vpop.permute.xlu0 %506
  %568 = vrot.lane.b32.xlu0 %v418, 4
  %v569 = vpop.permute.xlu0 %568
  %570 = vrot.lane.b32.xlu0 %v419, 4
  %v571 = vpop.permute.xlu0 %570
  %572 = vrot.lane.b32.xlu0 %v420, 4
  %v573 = vpop.permute.xlu0 %572
  %574 = vrot.lane.b32.xlu0 %v421, 4
  %v575 = vpop.permute.xlu0 %574
  %576 = vrot.lane.b32.xlu0 %v422, 4
  %v577 = vpop.permute.xlu0 %576
  %578 = vrot.lane.b32.xlu0 %v423, 4
  %v579 = vpop.permute.xlu0 %578
  %580 = vrot.lane.b32.xlu0 %v424, 4
  %v581 = vpop.permute.xlu0 %580
  %582 = vrot.lane.b32.xlu0 %v425, 4
  %v583 = vpop.permute.xlu0 %582
  %584 = vrot.lane.b32.xlu0 %v426, 4
  %v585 = vpop.permute.xlu0 %584
  %586 = vrot.lane.b32.xlu0 %v427, 4
  %v587 = vpop.permute.xlu0 %586
  %588 = vrot.lane.b32.xlu0 %v428, 4
  %v589 = vpop.permute.xlu0 %588
  %590 = vrot.lane.b32.xlu0 %v429, 4
  %v591 = vpop.permute.xlu0 %590
  %592 = vrot.lane.b32.xlu0 %v430, 4
  %v593 = vpop.permute.xlu0 %592
  %594 = vrot.lane.b32.xlu0 %v431, 4
  %v595 = vpop.permute.xlu0 %594
  %596 = vrot.lane.b32.xlu0 %v432, 4
  %v597 = vpop.permute.xlu0 %596
  %598 = vrot.lane.b32.xlu0 %v433, 4
  %v599 = vpop.permute.xlu0 %598
  %600 = vrot.lane.b32.xlu0 %v434, 4
  %v601 = vpop.permute.xlu0 %600
  %602 = vrot.lane.b32.xlu0 %v435, 4
  %v603 = vpop.permute.xlu0 %602
  %604 = vrot.lane.b32.xlu0 %v436, 4
  %v605 = vpop.permute.xlu0 %604
  %606 = vrot.lane.b32.xlu0 %v437, 4
  %v607 = vpop.permute.xlu0 %606
  %608 = vrot.lane.b32.xlu0 %v438, 4
  %v609 = vpop.permute.xlu0 %608
  %610 = vrot.lane.b32.xlu0 %v439, 4
  %v611 = vpop.permute.xlu0 %610
  %612 = vrot.lane.b32.xlu0 %v440, 4
  %v613 = vpop.permute.xlu0 %612
  %614 = vrot.lane.b32.xlu0 %v441, 4
  %v615 = vpop.permute.xlu0 %614
  %616 = vrot.lane.b32.xlu0 %v442, 4
  %v617 = vpop.permute.xlu0 %616
  %618 = vrot.lane.b32.xlu0 %v443, 4
  %v619 = vpop.permute.xlu0 %618
  %620 = vrot.lane.b32.xlu0 %v444, 4
  %v621 = vpop.permute.xlu0 %620
  %622 = vrot.lane.b32.xlu0 %v445, 4
  %v623 = vpop.permute.xlu0 %622
  %624 = vrot.lane.b32.xlu0 %v446, 4
  %v625 = vpop.permute.xlu0 %624
  %626 = vrot.lane.b32.xlu0 %v447, 4
  %v627 = vpop.permute.xlu0 %626
  %vm658 = vcmask 15360
  %v659 = vsel %vm658, %v238, %v449
  %v660 = vsel %vm658, %v239, %v451
  %v661 = vsel %vm658, %v240, %v453
  %v662 = vsel %vm658, %v241, %v455
  %v663 = vsel %vm658, %v242, %v457
  %v664 = vsel %vm658, %v243, %v459
  %v665 = vsel %vm658, %v244, %v461
  %v666 = vsel %vm658, %v245, %v463
  %v667 = vsel %vm658, %v246, %v465
  %v668 = vsel %vm658, %v247, %v467
  %v669 = vsel %vm658, %v248, %v469
  %v670 = vsel %vm658, %v249, %v471
  %v671 = vsel %vm658, %v250, %v473
  %v672 = vsel %vm658, %v251, %v475
  %v673 = vsel %vm658, %v252, %v477
  %v674 = vsel %vm658, %v253, %v479
  %v675 = vsel %vm658, %v254, %v481
  %v676 = vsel %vm658, %v255, %v483
  %v677 = vsel %vm658, %v256, %v485
  %v678 = vsel %vm658, %v257, %v487
  %v679 = vsel %vm658, %v258, %v489
  %v680 = vsel %vm658, %v259, %v491
  %v681 = vsel %vm658, %v260, %v493
  %v682 = vsel %vm658, %v261, %v495
  %v683 = vsel %vm658, %v262, %v497
  %v684 = vsel %vm658, %v263, %v499
  %v685 = vsel %vm658, %v264, %v501
  %v686 = vsel %vm658, %v265, %v503
  %v687 = vsel %vm658, %v266, %v505
  %v688 = vsel %vm658, %v267, %v507
  %vm689 = vcmask 31744
  %v690 = vsel %vm689, %v659, %v569
  %v691 = vsel %vm689, %v660, %v571
  %v692 = vsel %vm689, %v661, %v573
  %v693 = vsel %vm689, %v662, %v575
  %v694 = vsel %vm689, %v663, %v577
  %v695 = vsel %vm689, %v664, %v579
  %v696 = vsel %vm689, %v665, %v581
  %v697 = vsel %vm689, %v666, %v583
  %v698 = vsel %vm689, %v667, %v585
  %v699 = vsel %vm689, %v668, %v587
  %v700 = vsel %vm689, %v669, %v589
  %v701 = vsel %vm689, %v670, %v591
  %v702 = vsel %vm689, %v671, %v593
  %v703 = vsel %vm689, %v672, %v595
  %v704 = vsel %vm689, %v673, %v597
  %v705 = vsel %vm689, %v674, %v599
  %v706 = vsel %vm689, %v675, %v601
  %v707 = vsel %vm689, %v676, %v603
  %v708 = vsel %vm689, %v677, %v605
  %v709 = vsel %vm689, %v678, %v607
  %v710 = vsel %vm689, %v679, %v609
  %v711 = vsel %vm689, %v680, %v611
  %v712 = vsel %vm689, %v681, %v613
  %v713 = vsel %vm689, %v682, %v615
  %v714 = vsel %vm689, %v683, %v617
  %v715 = vsel %vm689, %v684, %v619
  %v716 = vsel %vm689, %v685, %v621
  %v717 = vsel %vm689, %v686, %v623
  %v718 = vsel %vm689, %v687, %v625
  %v719 = vsel %vm689, %v688, %v627
  %v720 = vpack.c.bf16 %v691, %v690
  %v721 = vpack.c.bf16 %v693, %v692
  %v722 = vpack.c.bf16 %v695, %v694
  %v723 = vpack.c.bf16 %v697, %v696
  %v724 = vpack.c.bf16 %v699, %v698
  %v725 = vpack.c.bf16 %v701, %v700
  %v726 = vpack.c.bf16 %v703, %v702
  %v727 = vpack.c.bf16 %v705, %v704
  %v728 = vpack.c.bf16 %v707, %v706
  %v729 = vpack.c.bf16 %v709, %v708
  %v730 = vpack.c.bf16 %v711, %v710
  %v731 = vpack.c.bf16 %v713, %v712
  %v732 = vpack.c.bf16 %v715, %v714
  %v733 = vpack.c.bf16 %v717, %v716
  %v734 = vpack.c.bf16 %v719, %v718
  %v735 = vld [vmem:[%s1] sm:$0x7]
  %v737 = vlaneseq
  %v738 = vshrl.u32 %v737, 7
  %v739 = vsub.s32 0, %v738
  %v740 = vrot.slane %v24, %v739
  %vm742 = vcmask 48128
  %v744 = vsel %vm742, %v720, 0
  %v747 = vsel %vm742, %v721, 0
  %v750 = vsel %vm742, %v722, 0
  %v753 = vsel %vm742, %v723, 0
  %v756 = vsel %vm742, %v724, 0
  %v759 = vsel %vm742, %v725, 0
  %v762 = vsel %vm742, %v726, 0
  %v765 = vsel %vm742, %v727, 0
  %v768 = vsel %vm742, %v728, 0
  %v771 = vsel %vm742, %v729, 0
  %v774 = vsel %vm742, %v730, 0
  %v777 = vsel %vm742, %v731, 0
  %v780 = vsel %vm742, %v732, 0
  %v783 = vsel %vm742, %v733, 0
  %v786 = vsel %vm742, %v734, 0
  %vm788 = vcmask 1042432
  %v790 = vsel %vm788, %v735, 0
  %792 = vmatprep.subr.bf16.mxu0 0
  %793 = vmatpush1.bf16.msra.mxu0 %v790
  %794 = vmatprep.subr.bf16.mxu0 0
  %795 = vmatpush1.bf16.msra.mxu0 0
  %796 = vmatprep.subr.bf16.mxu0 0
  %797 = vmatpush1.bf16.msra.mxu0 0
  %798 = vmatprep.subr.bf16.mxu0 0
  %799 = vmatpush1.bf16.msra.mxu0 0
  %800 = vmatprep.subr.bf16.mxu0 0
  %801 = vmatpush1.bf16.msra.mxu0 0
  %802 = vmatprep.subr.bf16.mxu0 0
  %803 = vmatpush1.bf16.msra.mxu0 0
  %804 = vmatprep.subr.bf16.mxu0 0
  %805 = vmatpush1.bf16.msra.mxu0 0
  %806 = vmatprep.subr.bf16.mxu0 0
  %807 = vmatpush1.bf16.msra.mxu0 0
  %808 = vmatprep.subr.bf16.mxu0 0
  %809 = vmatpush1.bf16.msra.mxu0 0
  %810 = vmatprep.subr.bf16.mxu0 0
  %811 = vmatpush1.bf16.msra.mxu0 0
  %812 = vmatprep.subr.bf16.mxu0 0
  %813 = vmatpush1.bf16.msra.mxu0 0
  %814 = vmatprep.subr.bf16.mxu0 0
  %815 = vmatpush1.bf16.msra.mxu0 0
  %816 = vmatprep.subr.bf16.mxu0 0
  %817 = vmatpush1.bf16.msra.mxu0 0
  %818 = vmatprep.subr.bf16.mxu0 0
  %819 = vmatpush1.bf16.msra.mxu0 0
  %820 = vmatprep.subr.bf16.mxu0 0
  %821 = vmatpush1.bf16.msra.mxu0 0
  %822 = vmatprep.subr.bf16.mxu0 0
  %823 = vmatpush1.bf16.msra.mxu0 0
  %824 = vmatprep.mubr.bf16.mxu0 0
  %825 = vmatmul.mubr.bf16.gmra.mrb[0].mxu0 %v744
  %v826 = vpop.f32.mrb[0].mxu0
  %v827 = vadd.f32 %v740, %v826
  %v828 = vpop.f32.mrb[0].mxu0
  %v829 = vpop.f32.mrb[0].mxu0
  %v830 = vadd.f32 %v740, %v829
  %v831 = vpop.f32.mrb[0].mxu0
  %832 = vmatprep.mubr.bf16.mxu0 0
  %833 = vmatmul.mubr.bf16.gmra.mrb[0].mxu0 %v747
  %v834 = vpop.f32.mrb[0].mxu0
  %v835 = vadd.f32 %v740, %v834
  %v836 = vpop.f32.mrb[0].mxu0
  %v837 = vpop.f32.mrb[0].mxu0
  %v838 = vadd.f32 %v740, %v837
  %v839 = vpop.f32.mrb[0].mxu0
  %840 = vmatprep.mubr.bf16.mxu0 0
  %841 = vmatmul.mubr.bf16.gmra.mrb[0].mxu0 %v750
  %v842 = vpop.f32.mrb[0].mxu0
  %v843 = vadd.f32 %v740, %v842
  %v844 = vpop.f32.mrb[0].mxu0
  %v845 = vpop.f32.mrb[0].mxu0
  %v846 = vadd.f32 %v740, %v845
  %v847 = vpop.f32.mrb[0].mxu0
  %848 = vmatprep.mubr.bf16.mxu0 0
  %849 = vmatmul.mubr.bf16.gmra.mrb[0].mxu0 %v753
  %v850 = vpop.f32.mrb[0].mxu0
  %v851 = vadd.f32 %v740, %v850
  %v852 = vpop.f32.mrb[0].mxu0
  %v853 = vpop.f32.mrb[0].mxu0
  %v854 = vadd.f32 %v740, %v853
  %v855 = vpop.f32.mrb[0].mxu0
  %856 = vmatprep.mubr.bf16.mxu0 0
  %857 = vmatmul.mubr.bf16.gmra.mrb[0].mxu0 %v756
  %v858 = vpop.f32.mrb[0].mxu0
  %v859 = vadd.f32 %v740, %v858
  %v860 = vpop.f32.mrb[0].mxu0
  %v861 = vpop.f32.mrb[0].mxu0
  %v862 = vadd.f32 %v740, %v861
  %v863 = vpop.f32.mrb[0].mxu0
  %864 = vmatprep.mubr.bf16.mxu0 0
  %865 = vmatmul.mubr.bf16.gmra.mrb[0].mxu0 %v759
  %v866 = vpop.f32.mrb[0].mxu0
  %v867 = vadd.f32 %v740, %v866
  %v868 = vpop.f32.mrb[0].mxu0
  %v869 = vpop.f32.mrb[0].mxu0
  %v870 = vadd.f32 %v740, %v869
  %v871 = vpop.f32.mrb[0].mxu0
  %872 = vmatprep.mubr.bf16.mxu0 0
  %873 = vmatmul.mubr.bf16.gmra.mrb[0].mxu0 %v762
  %v874 = vpop.f32.mrb[0].mxu0
  %v875 = vadd.f32 %v740, %v874
  %v876 = vpop.f32.mrb[0].mxu0
  %v877 = vpop.f32.mrb[0].mxu0
  %v878 = vadd.f32 %v740, %v877
  %v879 = vpop.f32.mrb[0].mxu0
  %880 = vmatprep.mubr.bf16.mxu0 0
  %881 = vmatmul.mubr.bf16.gmra.mrb[0].mxu0 %v765
  %v882 = vpop.f32.mrb[0].mxu0
  %v883 = vadd.f32 %v740, %v882
  %v884 = vpop.f32.mrb[0].mxu0
  %v885 = vpop.f32.mrb[0].mxu0
  %v886 = vadd.f32 %v740, %v885
  %v887 = vpop.f32.mrb[0].mxu0
  %888 = vmatprep.mubr.bf16.mxu0 0
  %889 = vmatmul.mubr.bf16.gmra.mrb[0].mxu0 %v768
  %v890 = vpop.f32.mrb[0].mxu0
  %v891 = vadd.f32 %v740, %v890
  %v892 = vpop.f32.mrb[0].mxu0
  %v893 = vpop.f32.mrb[0].mxu0
  %v894 = vadd.f32 %v740, %v893
  %v895 = vpop.f32.mrb[0].mxu0
  %896 = vmatprep.mubr.bf16.mxu0 0
  %897 = vmatmul.mubr.bf16.gmra.mrb[0].mxu0 %v771
  %v898 = vpop.f32.mrb[0].mxu0
  %v899 = vadd.f32 %v740, %v898
  %v900 = vpop.f32.mrb[0].mxu0
  %v901 = vpop.f32.mrb[0].mxu0
  %v902 = vadd.f32 %v740, %v901
  %v903 = vpop.f32.mrb[0].mxu0
  %904 = vmatprep.mubr.bf16.mxu0 0
  %905 = vmatmul.mubr.bf16.gmra.mrb[0].mxu0 %v774
  %v906 = vpop.f32.mrb[0].mxu0
  %v907 = vadd.f32 %v740, %v906
  %v908 = vpop.f32.mrb[0].mxu0
  %v909 = vpop.f32.mrb[0].mxu0
  %v910 = vadd.f32 %v740, %v909
  %v911 = vpop.f32.mrb[0].mxu0
  %912 = vmatprep.mubr.bf16.mxu0 0
  %913 = vmatmul.mubr.bf16.gmra.mrb[0].mxu0 %v777
  %v914 = vpop.f32.mrb[0].mxu0
  %v915 = vadd.f32 %v740, %v914
  %v916 = vpop.f32.mrb[0].mxu0
  %v917 = vpop.f32.mrb[0].mxu0
  %v918 = vadd.f32 %v740, %v917
  %v919 = vpop.f32.mrb[0].mxu0
  %920 = vmatprep.mubr.bf16.mxu0 0
  %921 = vmatmul.mubr.bf16.gmra.mrb[0].mxu0 %v780
  %v922 = vpop.f32.mrb[0].mxu0
  %v923 = vadd.f32 %v740, %v922
  %v924 = vpop.f32.mrb[0].mxu0
  %v925 = vpop.f32.mrb[0].mxu0
  %v926 = vadd.f32 %v740, %v925
  %v927 = vpop.f32.mrb[0].mxu0
  %928 = vmatprep.mubr.bf16.mxu0 0
  %929 = vmatmul.mubr.bf16.gmra.mrb[0].mxu0 %v783
  %v930 = vpop.f32.mrb[0].mxu0
  %v931 = vadd.f32 %v740, %v930
  %v932 = vpop.f32.mrb[0].mxu0
  %v933 = vpop.f32.mrb[0].mxu0
  %v934 = vadd.f32 %v740, %v933
  %v935 = vpop.f32.mrb[0].mxu0
  %936 = vmatprep.mubr.bf16.mxu0 0
  %937 = vmatmul.mubr.bf16.gmra.mrb[0].mxu0 %v786
  %v938 = vpop.f32.mrb[0].mxu0
  %v939 = vadd.f32 %v740, %v938
  %v940 = vpop.f32.mrb[0].mxu0
  %v941 = vpop.f32.mrb[0].mxu0
  %v942 = vadd.f32 %v740, %v941
  %v943 = vpop.f32.mrb[0].mxu0
  %944 = vdwg.mxu0
  %v945 = vmax.f32 %v827, 0.0
  %v946 = vmax.f32 %v830, 0.0
  %v947 = vmax.f32 %v835, 0.0
  %v948 = vmax.f32 %v838, 0.0
  %v949 = vmax.f32 %v843, 0.0
  %v950 = vmax.f32 %v846, 0.0
  %v951 = vmax.f32 %v851, 0.0
  %v952 = vmax.f32 %v854, 0.0
  %v953 = vmax.f32 %v859, 0.0
  %v954 = vmax.f32 %v862, 0.0
  %v955 = vmax.f32 %v867, 0.0
  %v956 = vmax.f32 %v870, 0.0
  %v957 = vmax.f32 %v875, 0.0
  %v958 = vmax.f32 %v878, 0.0
  %v959 = vmax.f32 %v883, 0.0
  %v960 = vmax.f32 %v886, 0.0
  %v961 = vmax.f32 %v891, 0.0
  %v962 = vmax.f32 %v894, 0.0
  %v963 = vmax.f32 %v899, 0.0
  %v964 = vmax.f32 %v902, 0.0
  %v965 = vmax.f32 %v907, 0.0
  %v966 = vmax.f32 %v910, 0.0
  %v967 = vmax.f32 %v915, 0.0
  %v968 = vmax.f32 %v918, 0.0
  %v969 = vmax.f32 %v923, 0.0
  %v970 = vmax.f32 %v926, 0.0
  %v971 = vmax.f32 %v931, 0.0
  %v972 = vmax.f32 %v934, 0.0
  %v973 = vmax.f32 %v939, 0.0
  %v974 = vmax.f32 %v942, 0.0
  %vm975 = vcmask 64512
  %976 = vst.msk [vmem:[#allocation2] sm:$0xff] %vm975, %v945
  %977 = vst.msk [vmem:[#allocation2 + $0x8] sm:$0xff] %vm975, %v946
  %978 = vst.msk [vmem:[#allocation2 + $0x10] sm:$0xff] %vm975, %v947
  %979 = vst.msk [vmem:[#allocation2 + $0x18] sm:$0xff] %vm975, %v948
  %980 = vst.msk [vmem:[#allocation2 + $0x20] sm:$0xff] %vm975, %v949
  %981 = vst.msk [vmem:[#allocation2 + $0x28] sm:$0xff] %vm975, %v950
  %982 = vst.msk [vmem:[#allocation2 + $0x30] sm:$0xff] %vm975, %v951
  %983 = vst.msk [vmem:[#allocation2 + $0x38] sm:$0xff] %vm975, %v952
  %984 = vst.msk [vmem:[#allocation2 + $0x40] sm:$0xff] %vm975, %v953
  %985 = vst.msk [vmem:[#allocation2 + $0x48] sm:$0xff] %vm975, %v954
  %986 = vst.msk [vmem:[#allocation2 + $0x50] sm:$0xff] %vm975, %v955
  %987 = vst.msk [vmem:[#allocation2 + $0x58] sm:$0xff] %vm975, %v956
  %988 = vst.msk [vmem:[#allocation2 + $0x60] sm:$0xff] %vm975, %v957
  %989 = vst.msk [vmem:[#allocation2 + $0x68] sm:$0xff] %vm975, %v958
  %990 = vst.msk [vmem:[#allocation2 + $0x70] sm:$0xff] %vm975, %v959
  %991 = vst.msk [vmem:[#allocation2 + $0x78] sm:$0xff] %vm975, %v960
  %992 = vst.msk [vmem:[#allocation2 + $0x80] sm:$0xff] %vm975, %v961
  %993 = vst.msk [vmem:[#allocation2 + $0x88] sm:$0xff] %vm975, %v962
  %994 = vst.msk [vmem:[#allocation2 + $0x90] sm:$0xff] %vm975, %v963
  %995 = vst.msk [vmem:[#allocation2 + $0x98] sm:$0xff] %vm975, %v964
  %996 = vst.msk [vmem:[#allocation2 + $0xa0] sm:$0xff] %vm975, %v965
  %997 = vst.msk [vmem:[#allocation2 + $0xa8] sm:$0xff] %vm975, %v966
  %998 = vst.msk [vmem:[#allocation2 + $0xb0] sm:$0xff] %vm975, %v967
  %999 = vst.msk [vmem:[#allocation2 + $0xb8] sm:$0xff] %vm975, %v968
  %1000 = vst.msk [vmem:[#allocation2 + $0xc0] sm:$0xff] %vm975, %v969
  %1001 = vst.msk [vmem:[#allocation2 + $0xc8] sm:$0xff] %vm975, %v970
  %1002 = vst.msk [vmem:[#allocation2 + $0xd0] sm:$0xff] %vm975, %v971
  %1003 = vst.msk [vmem:[#allocation2 + $0xd8] sm:$0xff] %vm975, %v972
  %1004 = vst.msk [vmem:[#allocation2 + $0xe0] sm:$0xff] %vm975, %v973
  %1005 = vst.msk [vmem:[#allocation2 + $0xe8] sm:$0xff] %vm975, %v974
  %v1006 = vld [vmem:[#allocation2] ss:$2 sm:$0xff]
  %s1007 = scalar_lea.vmem [#allocation2], 16
  %v1008 = vld [vmem:[%s1007] ss:$2 sm:$0xff]
  %s1009 = scalar_lea.vmem [#allocation2], 32
  %v1010 = vld [vmem:[%s1009] ss:$2 sm:$0xff]
  %s1011 = scalar_lea.vmem [#allocation2], 48
  %v1012 = vld [vmem:[%s1011] ss:$2 sm:$0xff]
  %s1013 = scalar_lea.vmem [#allocation2], 64
  %v1014 = vld [vmem:[%s1013] ss:$2 sm:$0xff]
  %s1015 = scalar_lea.vmem [#allocation2], 80
  %v1016 = vld [vmem:[%s1015] ss:$2 sm:$0xff]
  %s1017 = scalar_lea.vmem [#allocation2], 96
  %v1018 = vld [vmem:[%s1017] ss:$2 sm:$0xff]
  %s1019 = scalar_lea.vmem [#allocation2], 112
  %v1020 = vld [vmem:[%s1019] ss:$2 sm:$0xff]
  %s1021 = scalar_lea.vmem [#allocation2], 128
  %v1022 = vld [vmem:[%s1021] ss:$2 sm:$0xff]
  %s1023 = scalar_lea.vmem [#allocation2], 144
  %v1024 = vld [vmem:[%s1023] ss:$2 sm:$0xff]
  %s1025 = scalar_lea.vmem [#allocation2], 160
  %v1026 = vld [vmem:[%s1025] ss:$2 sm:$0xff]
  %s1027 = scalar_lea.vmem [#allocation2], 176
  %v1028 = vld [vmem:[%s1027] ss:$2 sm:$0xff]
  %s1029 = scalar_lea.vmem [#allocation2], 192
  %v1030 = vld [vmem:[%s1029] ss:$2 sm:$0xff]
  %s1031 = scalar_lea.vmem [#allocation2], 208
  %v1032 = vld [vmem:[%s1031] ss:$2 sm:$0xff]
  %s1033 = scalar_lea.vmem [#allocation2], 224
  %v1034 = vld [vmem:[%s1033] ss:$2 sm:$0xff]
  %s1035 = scalar_lea.vmem [#allocation2], 1
  %v1036 = vld [vmem:[%s1035] ss:$2 sm:$0xff]
  %s1037 = scalar_lea.vmem [#allocation2], 17
  %v1038 = vld [vmem:[%s1037] ss:$2 sm:$0xff]
  %s1039 = scalar_lea.vmem [#allocation2], 33
  %v1040 = vld [vmem:[%s1039] ss:$2 sm:$0xff]
  %s1041 = scalar_lea.vmem [#allocation2], 49
  %v1042 = vld [vmem:[%s1041] ss:$2 sm:$0xff]
  %s1043 = scalar_lea.vmem [#allocation2], 65
  %v1044 = vld [vmem:[%s1043] ss:$2 sm:$0xff]
  %s1045 = scalar_lea.vmem [#allocation2], 81
  %v1046 = vld [vmem:[%s1045] ss:$2 sm:$0xff]
  %s1047 = scalar_lea.vmem [#allocation2], 97
  %v1048 = vld [vmem:[%s1047] ss:$2 sm:$0xff]
  %s1049 = scalar_lea.vmem [#allocation2], 113
  %v1050 = vld [vmem:[%s1049] ss:$2 sm:$0xff]
  %s1051 = scalar_lea.vmem [#allocation2], 129
  %v1052 = vld [vmem:[%s1051] ss:$2 sm:$0xff]
  %s1053 = scalar_lea.vmem [#allocation2], 145
  %v1054 = vld [vmem:[%s1053] ss:$2 sm:$0xff]
  %s1055 = scalar_lea.vmem [#allocation2], 161
  %v1056 = vld [vmem:[%s1055] ss:$2 sm:$0xff]
  %s1057 = scalar_lea.vmem [#allocation2], 177
  %v1058 = vld [vmem:[%s1057] ss:$2 sm:$0xff]
  %s1059 = scalar_lea.vmem [#allocation2], 193
  %v1060 = vld [vmem:[%s1059] ss:$2 sm:$0xff]
  %s1061 = scalar_lea.vmem [#allocation2], 209
  %v1062 = vld [vmem:[%s1061] ss:$2 sm:$0xff]
  %s1063 = scalar_lea.vmem [#allocation2], 225
  %v1064 = vld [vmem:[%s1063] ss:$2 sm:$0xff]
  %v1065 = vmax.f32 %v1006, %v1036
  %v1066 = vmax.f32 %v1008, %v1038
  %v1067 = vmax.f32 %v1010, %v1040
  %v1068 = vmax.f32 %v1012, %v1042
  %v1069 = vmax.f32 %v1014, %v1044
  %v1070 = vmax.f32 %v1016, %v1046
  %v1071 = vmax.f32 %v1018, %v1048
  %v1072 = vmax.f32 %v1020, %v1050
  %v1073 = vmax.f32 %v1022, %v1052
  %v1074 = vmax.f32 %v1024, %v1054
  %v1075 = vmax.f32 %v1026, %v1056
  %v1076 = vmax.f32 %v1028, %v1058
  %v1077 = vmax.f32 %v1030, %v1060
  %v1078 = vmax.f32 %v1032, %v1062
  %v1079 = vmax.f32 %v1034, %v1064
  %1080 = vst.msk [vmem:[#allocation3] sm:$0xff] %vm975, 0.0
  %1081 = vst.msk [vmem:[#allocation3 + $0x8] sm:$0xff] %vm975, 0.0
  %1082 = vst.msk [vmem:[#allocation3 + $0x10] sm:$0xff] %vm975, 0.0
  %1083 = vst.msk [vmem:[#allocation3 + $0x18] sm:$0xff] %vm975, 0.0
  %1084 = vst.msk [vmem:[#allocation3 + $0x20] sm:$0xff] %vm975, 0.0
  %1085 = vst.msk [vmem:[#allocation3 + $0x28] sm:$0xff] %vm975, 0.0
  %1086 = vst.msk [vmem:[#allocation3 + $0x30] sm:$0xff] %vm975, 0.0
  %1087 = vst.msk [vmem:[#allocation3 + $0x38] sm:$0xff] %vm975, 0.0
  %1088 = vst.msk [vmem:[#allocation3 + $0x40] sm:$0xff] %vm975, 0.0
  %1089 = vst.msk [vmem:[#allocation3 + $0x48] sm:$0xff] %vm975, 0.0
  %1090 = vst.msk [vmem:[#allocation3 + $0x50] sm:$0xff] %vm975, 0.0
  %1091 = vst.msk [vmem:[#allocation3 + $0x58] sm:$0xff] %vm975, 0.0
  %1092 = vst.msk [vmem:[#allocation3 + $0x60] sm:$0xff] %vm975, 0.0
  %1093 = vst.msk [vmem:[#allocation3 + $0x68] sm:$0xff] %vm975, 0.0
  %1094 = vst.msk [vmem:[#allocation3 + $0x70] sm:$0xff] %vm975, 0.0
  %1095 = vst.msk [vmem:[#allocation3 + $0x78] sm:$0xff] %vm975, 0.0
  %1096 = vst.msk [vmem:[#allocation3 + $0x80] sm:$0xff] %vm975, 0.0
  %1097 = vst.msk [vmem:[#allocation3 + $0x8] sm:$0xff] %vm975, %v1065
  %1098 = vst.msk [vmem:[#allocation3 + $0x10] sm:$0xff] %vm975, %v1066
  %1099 = vst.msk [vmem:[#allocation3 + $0x18] sm:$0xff] %vm975, %v1067
  %1100 = vst.msk [vmem:[#allocation3 + $0x20] sm:$0xff] %vm975, %v1068
  %1101 = vst.msk [vmem:[#allocation3 + $0x28] sm:$0xff] %vm975, %v1069
  %1102 = vst.msk [vmem:[#allocation3 + $0x30] sm:$0xff] %vm975, %v1070
  %1103 = vst.msk [vmem:[#allocation3 + $0x38] sm:$0xff] %vm975, %v1071
  %1104 = vst.msk [vmem:[#allocation3 + $0x40] sm:$0xff] %vm975, %v1072
  %1105 = vst.msk [vmem:[#allocation3 + $0x48] sm:$0xff] %vm975, %v1073
  %1106 = vst.msk [vmem:[#allocation3 + $0x50] sm:$0xff] %vm975, %v1074
  %1107 = vst.msk [vmem:[#allocation3 + $0x58] sm:$0xff] %vm975, %v1075
  %1108 = vst.msk [vmem:[#allocation3 + $0x60] sm:$0xff] %vm975, %v1076
  %1109 = vst.msk [vmem:[#allocation3 + $0x68] sm:$0xff] %vm975, %v1077
  %1110 = vst.msk [vmem:[#allocation3 + $0x70] sm:$0xff] %vm975, %v1078
  %1111 = vst.msk [vmem:[#allocation3 + $0x78] sm:$0xff] %vm975, %v1079
  %v1112 = vld [vmem:[%s0 + $0x1] sm:$0xff]
  %v1113 = vld [vmem:[%s0 + $0x9] sm:$0xff]
  %v1114 = vld [vmem:[%s0 + $0x11] sm:$0xff]
  %v1115 = vld [vmem:[%s0 + $0x19] sm:$0xff]
  %v1116 = vld [vmem:[%s0 + $0x21] sm:$0xff]
  %v1117 = vld [vmem:[%s0 + $0x29] sm:$0xff]
  %v1118 = vld [vmem:[%s0 + $0x31] sm:$0xff]
  %v1119 = vld [vmem:[%s0 + $0x39] sm:$0xff]
  %v1120 = vld [vmem:[%s0 + $0x41] sm:$0xff]
  %v1121 = vld [vmem:[%s0 + $0x49] sm:$0xff]
  %v1122 = vld [vmem:[%s0 + $0x51] sm:$0xff]
  %v1123 = vld [vmem:[%s0 + $0x59] sm:$0xff]
  %v1124 = vld [vmem:[%s0 + $0x61] sm:$0xff]
  %v1125 = vld [vmem:[%s0 + $0x69] sm:$0xff]
  %v1126 = vld [vmem:[%s0 + $0x71] sm:$0xff]
  %v1127 = vld [vmem:[#allocation3 + $0x7] sm:$0xff]
  %v1128 = vld [vmem:[#allocation3 + $0xf] sm:$0xff]
  %v1129 = vld [vmem:[#allocation3 + $0x17] sm:$0xff]
  %v1130 = vld [vmem:[#allocation3 + $0x1f] sm:$0xff]
  %v1131 = vld [vmem:[#allocation3 + $0x27] sm:$0xff]
  %v1132 = vld [vmem:[#allocation3 + $0x2f] sm:$0xff]
  %v1133 = vld [vmem:[#allocation3 + $0x37] sm:$0xff]
  %v1134 = vld [vmem:[#allocation3 + $0x3f] sm:$0xff]
  %v1135 = vld [vmem:[#allocation3 + $0x47] sm:$0xff]
  %v1136 = vld [vmem:[#allocation3 + $0x4f] sm:$0xff]
  %v1137 = vld [vmem:[#allocation3 + $0x57] sm:$0xff]
  %v1138 = vld [vmem:[#allocation3 + $0x5f] sm:$0xff]
  %v1139 = vld [vmem:[#allocation3 + $0x67] sm:$0xff]
  %v1140 = vld [vmem:[#allocation3 + $0x6f] sm:$0xff]
  %v1141 = vld [vmem:[#allocation3 + $0x77] sm:$0xff]
  %1143 = vset.pattern.permute.xlu0 4
  %1144 = vperm.xlu0 %1143, %v1112
  %v1145 = vpop.permute.xlu0 %1144
  %1148 = vset.pattern.permute.xlu0 4
  %1149 = vperm.xlu0 %1148, %v1113
  %v1150 = vpop.permute.xlu0 %1149
  %1153 = vset.pattern.permute.xlu0 4
  %1154 = vperm.xlu0 %1153, %v1114
  %v1155 = vpop.permute.xlu0 %1154
  %1158 = vset.pattern.permute.xlu0 4
  %1159 = vperm.xlu0 %1158, %v1115
  %v1160 = vpop.permute.xlu0 %1159
  %1163 = vset.pattern.permute.xlu0 4
  %1164 = vperm.xlu0 %1163, %v1116
  %v1165 = vpop.permute.xlu0 %1164
  %1168 = vset.pattern.permute.xlu0 4
  %1169 = vperm.xlu0 %1168, %v1117
  %v1170 = vpop.permute.xlu0 %1169
  %1173 = vset.pattern.permute.xlu0 4
  %1174 = vperm.xlu0 %1173, %v1118
  %v1175 = vpop.permute.xlu0 %1174
  %1178 = vset.pattern.permute.xlu0 4
  %1179 = vperm.xlu0 %1178, %v1119
  %v1180 = vpop.permute.xlu0 %1179
  %1183 = vset.pattern.permute.xlu0 4
  %1184 = vperm.xlu0 %1183, %v1120
  %v1185 = vpop.permute.xlu0 %1184
  %1188 = vset.pattern.permute.xlu0 4
  %1189 = vperm.xlu0 %1188, %v1121
  %v1190 = vpop.permute.xlu0 %1189
  %1193 = vset.pattern.permute.xlu0 4
  %1194 = vperm.xlu0 %1193, %v1122
  %v1195 = vpop.permute.xlu0 %1194
  %1198 = vset.pattern.permute.xlu0 4
  %1199 = vperm.xlu0 %1198, %v1123
  %v1200 = vpop.permute.xlu0 %1199
  %1203 = vset.pattern.permute.xlu0 4
  %1204 = vperm.xlu0 %1203, %v1124
  %v1205 = vpop.permute.xlu0 %1204
  %1208 = vset.pattern.permute.xlu0 4
  %1209 = vperm.xlu0 %1208, %v1125
  %v1210 = vpop.permute.xlu0 %1209
  %1213 = vset.pattern.permute.xlu0 4
  %1214 = vperm.xlu0 %1213, %v1126
  %v1215 = vpop.permute.xlu0 %1214
  %v1217 = vmul.f32 %v1127, %v1145
  %v1218 = vmul.f32 %v1128, %v1150
  %v1219 = vmul.f32 %v1129, %v1155
  %v1220 = vmul.f32 %v1130, %v1160
  %v1221 = vmul.f32 %v1131, %v1165
  %v1222 = vmul.f32 %v1132, %v1170
  %v1223 = vmul.f32 %v1133, %v1175
  %v1224 = vmul.f32 %v1134, %v1180
  %v1225 = vmul.f32 %v1135, %v1185
  %v1226 = vmul.f32 %v1136, %v1190
  %v1227 = vmul.f32 %v1137, %v1195
  %v1228 = vmul.f32 %v1138, %v1200
  %v1229 = vmul.f32 %v1139, %v1205
  %v1230 = vmul.f32 %v1140, %v1210
  %v1231 = vmul.f32 %v1141, %v1215
  %v1232 = vld [vmem:[#allocation3 + $0x9] sm:$0xff]
  %v1233 = vld [vmem:[#allocation3 + $0x11] sm:$0xff]
  %v1234 = vld [vmem:[#allocation3 + $0x19] sm:$0xff]
  %v1235 = vld [vmem:[#allocation3 + $0x21] sm:$0xff]
  %v1236 = vld [vmem:[#allocation3 + $0x29] sm:$0xff]
  %v1237 = vld [vmem:[#allocation3 + $0x31] sm:$0xff]
  %v1238 = vld [vmem:[#allocation3 + $0x39] sm:$0xff]
  %v1239 = vld [vmem:[#allocation3 + $0x41] sm:$0xff]
  %v1240 = vld [vmem:[#allocation3 + $0x49] sm:$0xff]
  %v1241 = vld [vmem:[#allocation3 + $0x51] sm:$0xff]
  %v1242 = vld [vmem:[#allocation3 + $0x59] sm:$0xff]
  %v1243 = vld [vmem:[#allocation3 + $0x61] sm:$0xff]
  %v1244 = vld [vmem:[#allocation3 + $0x69] sm:$0xff]
  %v1245 = vld [vmem:[#allocation3 + $0x71] sm:$0xff]
  %v1246 = vld [vmem:[#allocation3 + $0x79] sm:$0xff]
  %1247 = vset.pattern.permute.xlu0 5
  %1248 = vperm.xlu0 %1247, %v1112
  %v1249 = vpop.permute.xlu0 %1248
  %1251 = vset.pattern.permute.xlu0 5
  %1252 = vperm.xlu0 %1251, %v1113
  %v1253 = vpop.permute.xlu0 %1252
  %1255 = vset.pattern.permute.xlu0 5
  %1256 = vperm.xlu0 %1255, %v1114
  %v1257 = vpop.permute.xlu0 %1256
  %1259 = vset.pattern.permute.xlu0 5
  %1260 = vperm.xlu0 %1259, %v1115
  %v1261 = vpop.permute.xlu0 %1260
  %1263 = vset.pattern.permute.xlu0 5
  %1264 = vperm.xlu0 %1263, %v1116
  %v1265 = vpop.permute.xlu0 %1264
  %1267 = vset.pattern.permute.xlu0 5
  %1268 = vperm.xlu0 %1267, %v1117
  %v1269 = vpop.permute.xlu0 %1268
  %1271 = vset.pattern.permute.xlu0 5
  %1272 = vperm.xlu0 %1271, %v1118
  %v1273 = vpop.permute.xlu0 %1272
  %1275 = vset.pattern.permute.xlu0 5
  %1276 = vperm.xlu0 %1275, %v1119
  %v1277 = vpop.permute.xlu0 %1276
  %1279 = vset.pattern.permute.xlu0 5
  %1280 = vperm.xlu0 %1279, %v1120
  %v1281 = vpop.permute.xlu0 %1280
  %1283 = vset.pattern.permute.xlu0 5
  %1284 = vperm.xlu0 %1283, %v1121
  %v1285 = vpop.permute.xlu0 %1284
  %1287 = vset.pattern.permute.xlu0 5
  %1288 = vperm.xlu0 %1287, %v1122
  %v1289 = vpop.permute.xlu0 %1288
  %1291 = vset.pattern.permute.xlu0 5
  %1292 = vperm.xlu0 %1291, %v1123
  %v1293 = vpop.permute.xlu0 %1292
  %1295 = vset.pattern.permute.xlu0 5
  %1296 = vperm.xlu0 %1295, %v1124
  %v1297 = vpop.permute.xlu0 %1296
  %1299 = vset.pattern.permute.xlu0 5
  %1300 = vperm.xlu0 %1299, %v1125
  %v1301 = vpop.permute.xlu0 %1300
  %1303 = vset.pattern.permute.xlu0 5
  %1304 = vperm.xlu0 %1303, %v1126
  %v1305 = vpop.permute.xlu0 %1304
  %v1307 = vmul.f32 %v1232, %v1249
  %v1308 = vmul.f32 %v1233, %v1253
  %v1309 = vmul.f32 %v1234, %v1257
  %v1310 = vmul.f32 %v1235, %v1261
  %v1311 = vmul.f32 %v1236, %v1265
  %v1312 = vmul.f32 %v1237, %v1269
  %v1313 = vmul.f32 %v1238, %v1273
  %v1314 = vmul.f32 %v1239, %v1277
  %v1315 = vmul.f32 %v1240, %v1281
  %v1316 = vmul.f32 %v1241, %v1285
  %v1317 = vmul.f32 %v1242, %v1289
  %v1318 = vmul.f32 %v1243, %v1293
  %v1319 = vmul.f32 %v1244, %v1297
  %v1320 = vmul.f32 %v1245, %v1301
  %v1321 = vmul.f32 %v1246, %v1305
  %1337 = vrot.lane.b32.xlu0 %v1065, 8
  %v1338 = vpop.permute.xlu0 %1337
  %1339 = vrot.lane.b32.xlu0 %v1066, 8
  %v1340 = vpop.permute.xlu0 %1339
  %1341 = vrot.lane.b32.xlu0 %v1067, 8
  %v1342 = vpop.permute.xlu0 %1341
  %1343 = vrot.lane.b32.xlu0 %v1068, 8
  %v1344 = vpop.permute.xlu0 %1343
  %1345 = vrot.lane.b32.xlu0 %v1069, 8
  %v1346 = vpop.permute.xlu0 %1345
  %1347 = vrot.lane.b32.xlu0 %v1070, 8
  %v1348 = vpop.permute.xlu0 %1347
  %1349 = vrot.lane.b32.xlu0 %v1071, 8
  %v1350 = vpop.permute.xlu0 %1349
  %1351 = vrot.lane.b32.xlu0 %v1072, 8
  %v1352 = vpop.permute.xlu0 %1351
  %1353 = vrot.lane.b32.xlu0 %v1073, 8
  %v1354 = vpop.permute.xlu0 %1353
  %1355 = vrot.lane.b32.xlu0 %v1074, 8
  %v1356 = vpop.permute.xlu0 %1355
  %1357 = vrot.lane.b32.xlu0 %v1075, 8
  %v1358 = vpop.permute.xlu0 %1357
  %1359 = vrot.lane.b32.xlu0 %v1076, 8
  %v1360 = vpop.permute.xlu0 %1359
  %1361 = vrot.lane.b32.xlu0 %v1077, 8
  %v1362 = vpop.permute.xlu0 %1361
  %1363 = vrot.lane.b32.xlu0 %v1078, 8
  %v1364 = vpop.permute.xlu0 %1363
  %1365 = vrot.lane.b32.xlu0 %v1079, 8
  %v1366 = vpop.permute.xlu0 %1365
  %1397 = vrot.lane.b32.xlu0 %v1307, 16
  %v1398 = vpop.permute.xlu0 %1397
  %1399 = vrot.lane.b32.xlu0 %v1308, 16
  %v1400 = vpop.permute.xlu0 %1399
  %1401 = vrot.lane.b32.xlu0 %v1309, 16
  %v1402 = vpop.permute.xlu0 %1401
  %1403 = vrot.lane.b32.xlu0 %v1310, 16
  %v1404 = vpop.permute.xlu0 %1403
  %1405 = vrot.lane.b32.xlu0 %v1311, 16
  %v1406 = vpop.permute.xlu0 %1405
  %1407 = vrot.lane.b32.xlu0 %v1312, 16
  %v1408 = vpop.permute.xlu0 %1407
  %1409 = vrot.lane.b32.xlu0 %v1313, 16
  %v1410 = vpop.permute.xlu0 %1409
  %1411 = vrot.lane.b32.xlu0 %v1314, 16
  %v1412 = vpop.permute.xlu0 %1411
  %1413 = vrot.lane.b32.xlu0 %v1315, 16
  %v1414 = vpop.permute.xlu0 %1413
  %1415 = vrot.lane.b32.xlu0 %v1316, 16
  %v1416 = vpop.permute.xlu0 %1415
  %1417 = vrot.lane.b32.xlu0 %v1317, 16
  %v1418 = vpop.permute.xlu0 %1417
  %1419 = vrot.lane.b32.xlu0 %v1318, 16
  %v1420 = vpop.permute.xlu0 %1419
  %1421 = vrot.lane.b32.xlu0 %v1319, 16
  %v1422 = vpop.permute.xlu0 %1421
  %1423 = vrot.lane.b32.xlu0 %v1320, 16
  %v1424 = vpop.permute.xlu0 %1423
  %1425 = vrot.lane.b32.xlu0 %v1321, 16
  %v1426 = vpop.permute.xlu0 %1425
  %v1442 = vsel %vm975, %v1217, %v1338
  %v1443 = vsel %vm975, %v1218, %v1340
  %v1444 = vsel %vm975, %v1219, %v1342
  %v1445 = vsel %vm975, %v1220, %v1344
  %v1446 = vsel %vm975, %v1221, %v1346
  %v1447 = vsel %vm975, %v1222, %v1348
  %v1448 = vsel %vm975, %v1223, %v1350
  %v1449 = vsel %vm975, %v1224, %v1352
  %v1450 = vsel %vm975, %v1225, %v1354
  %v1451 = vsel %vm975, %v1226, %v1356
  %v1452 = vsel %vm975, %v1227, %v1358
  %v1453 = vsel %vm975, %v1228, %v1360
  %v1454 = vsel %vm975, %v1229, %v1362
  %v1455 = vsel %vm975, %v1230, %v1364
  %v1456 = vsel %vm975, %v1231, %v1366
  %vm1457 = vcmask 130048
  %v1458 = vsel %vm1457, %v1442, %v1398
  %v1459 = vsel %vm1457, %v1443, %v1400
  %v1460 = vsel %vm1457, %v1444, %v1402
  %v1461 = vsel %vm1457, %v1445, %v1404
  %v1462 = vsel %vm1457, %v1446, %v1406
  %v1463 = vsel %vm1457, %v1447, %v1408
  %v1464 = vsel %vm1457, %v1448, %v1410
  %v1465 = vsel %vm1457, %v1449, %v1412
  %v1466 = vsel %vm1457, %v1450, %v1414
  %v1467 = vsel %vm1457, %v1451, %v1416
  %v1468 = vsel %vm1457, %v1452, %v1418
  %v1469 = vsel %vm1457, %v1453, %v1420
  %v1470 = vsel %vm1457, %v1454, %v1422
  %v1471 = vsel %vm1457, %v1455, %v1424
  %v1472 = vsel %vm1457, %v1456, %v1426
  %v1473 = vpack.c.bf16 %v1459, %v1458
  %v1474 = vpack.c.bf16 %v1461, %v1460
  %v1475 = vpack.c.bf16 %v1463, %v1462
  %v1476 = vpack.c.bf16 %v1465, %v1464
  %v1477 = vpack.c.bf16 %v1467, %v1466
  %v1478 = vpack.c.bf16 %v1469, %v1468
  %v1479 = vpack.c.bf16 %v1471, %v1470
  %v1480 = vpack.c.bf16 %v1472, %v1472
  %v1481 = vld [vmem:[%s2] sm:$0xf]
  %v1482 = vld [vmem:[%s2 + $0x4] sm:$0xf]
  %v1483 = vld [vmem:[%s2 + $0x8] sm:$0xf]
  %v1485 = vlaneseq
  %v1486 = vshrl.u32 %v1485, 7
  %v1487 = vsub.s32 0, %v1486
  %v1488 = vrot.slane %v25, %v1487
  %v1493 = vunpack.c.l.b16 %v1481
  %v1494 = vunpack.c.l.b16 %v1482
  %v1495 = vunpack.c.l.b16 %v1483
  %v1496 = vpack.c.b16 %v1494, %v1493
  %v1497 = vpack.c.b16 %v1495, %v1495
  %vm1499 = vcmask 195584
  %v1501 = vsel %vm1499, %v1473, 0
  %v1504 = vsel %vm1499, %v1474, 0
  %v1507 = vsel %vm1499, %v1475, 0
  %v1510 = vsel %vm1499, %v1476, 0
  %v1513 = vsel %vm1499, %v1477, 0
  %v1516 = vsel %vm1499, %v1478, 0
  %v1519 = vsel %vm1499, %v1479, 0
  %v1522 = vsel %vm1499, %v1480, 0
  %vm1524 = vcmask 1043456
  %v1526 = vsel %vm1524, %v1497, 0
  %1528 = vmatprep.subr.bf16.mxu0 0
  %1529 = vmatpush1.bf16.msra.mxu0 %v1496
  %1530 = vmatprep.subr.bf16.mxu0 0
  %1531 = vmatpush1.bf16.msra.mxu0 %v1526
  %1532 = vmatprep.subr.bf16.mxu0 0
  %1533 = vmatpush1.bf16.msra.mxu0 0
  %1534 = vmatprep.subr.bf16.mxu0 0
  %1535 = vmatpush1.bf16.msra.mxu0 0
  %1536 = vmatprep.subr.bf16.mxu0 0
  %1537 = vmatpush1.bf16.msra.mxu0 0
  %1538 = vmatprep.subr.bf16.mxu0 0
  %1539 = vmatpush1.bf16.msra.mxu0 0
  %1540 = vmatprep.subr.bf16.mxu0 0
  %1541 = vmatpush1.bf16.msra.mxu0 0
  %1542 = vmatprep.subr.bf16.mxu0 0
  %1543 = vmatpush1.bf16.msra.mxu0 0
  %1544 = vmatprep.subr.bf16.mxu0 0
  %1545 = vmatpush1.bf16.msra.mxu0 0
  %1546 = vmatprep.subr.bf16.mxu0 0
  %1547 = vmatpush1.bf16.msra.mxu0 0
  %1548 = vmatprep.subr.bf16.mxu0 0
  %1549 = vmatpush1.bf16.msra.mxu0 0
  %1550 = vmatprep.subr.bf16.mxu0 0
  %1551 = vmatpush1.bf16.msra.mxu0 0
  %1552 = vmatprep.subr.bf16.mxu0 0
  %1553 = vmatpush1.bf16.msra.mxu0 0
  %1554 = vmatprep.subr.bf16.mxu0 0
  %1555 = vmatpush1.bf16.msra.mxu0 0
  %1556 = vmatprep.subr.bf16.mxu0 0
  %1557 = vmatpush1.bf16.msra.mxu0 0
  %1558 = vmatprep.subr.bf16.mxu0 0
  %1559 = vmatpush1.bf16.msra.mxu0 0
  %1560 = vmatprep.mubr.bf16.mxu0 0
  %1561 = vmatmul.mubr.bf16.gmra.mrb[0].mxu0 %v1501
  %v1562 = vpop.f32.mrb[0].mxu0
  %v1563 = vadd.f32 %v1488, %v1562
  %v1564 = vpop.f32.mrb[0].mxu0
  %v1565 = vpop.f32.mrb[0].mxu0
  %v1566 = vadd.f32 %v1488, %v1565
  %v1567 = vpop.f32.mrb[0].mxu0
  %1568 = vmatprep.mubr.bf16.mxu0 0
  %1569 = vmatmul.mubr.bf16.gmra.mrb[0].mxu0 %v1504
  %v1570 = vpop.f32.mrb[0].mxu0
  %v1571 = vadd.f32 %v1488, %v1570
  %v1572 = vpop.f32.mrb[0].mxu0
  %v1573 = vpop.f32.mrb[0].mxu0
  %v1574 = vadd.f32 %v1488, %v1573
  %v1575 = vpop.f32.mrb[0].mxu0
  %1576 = vmatprep.mubr.bf16.mxu0 0
  %1577 = vmatmul.mubr.bf16.gmra.mrb[0].mxu0 %v1507
  %v1578 = vpop.f32.mrb[0].mxu0
  %v1579 = vadd.f32 %v1488, %v1578
  %v1580 = vpop.f32.mrb[0].mxu0
  %v1581 = vpop.f32.mrb[0].mxu0
  %v1582 = vadd.f32 %v1488, %v1581
  %v1583 = vpop.f32.mrb[0].mxu0
  %1584 = vmatprep.mubr.bf16.mxu0 0
  %1585 = vmatmul.mubr.bf16.gmra.mrb[0].mxu0 %v1510
  %v1586 = vpop.f32.mrb[0].mxu0
  %v1587 = vadd.f32 %v1488, %v1586
  %v1588 = vpop.f32.mrb[0].mxu0
  %v1589 = vpop.f32.mrb[0].mxu0
  %v1590 = vadd.f32 %v1488, %v1589
  %v1591 = vpop.f32.mrb[0].mxu0
  %1592 = vmatprep.mubr.bf16.mxu0 0
  %1593 = vmatmul.mubr.bf16.gmra.mrb[0].mxu0 %v1513
  %v1594 = vpop.f32.mrb[0].mxu0
  %v1595 = vadd.f32 %v1488, %v1594
  %v1596 = vpop.f32.mrb[0].mxu0
  %v1597 = vpop.f32.mrb[0].mxu0
  %v1598 = vadd.f32 %v1488, %v1597
  %v1599 = vpop.f32.mrb[0].mxu0
  %1600 = vmatprep.mubr.bf16.mxu0 0
  %1601 = vmatmul.mubr.bf16.gmra.mrb[0].mxu0 %v1516
  %v1602 = vpop.f32.mrb[0].mxu0
  %v1603 = vadd.f32 %v1488, %v1602
  %v1604 = vpop.f32.mrb[0].mxu0
  %v1605 = vpop.f32.mrb[0].mxu0
  %v1606 = vadd.f32 %v1488, %v1605
  %v1607 = vpop.f32.mrb[0].mxu0
  %1608 = vmatprep.mubr.bf16.mxu0 0
  %1609 = vmatmul.mubr.bf16.gmra.mrb[0].mxu0 %v1519
  %v1610 = vpop.f32.mrb[0].mxu0
  %v1611 = vadd.f32 %v1488, %v1610
  %v1612 = vpop.f32.mrb[0].mxu0
  %v1613 = vpop.f32.mrb[0].mxu0
  %v1614 = vadd.f32 %v1488, %v1613
  %v1615 = vpop.f32.mrb[0].mxu0
  %1616 = vmatprep.mubr.bf16.mxu0 0
  %1617 = vmatmul.mubr.bf16.gmra.mrb[0].mxu0 %v1522
  %v1618 = vpop.f32.mrb[0].mxu0
  %v1619 = vadd.f32 %v1488, %v1618
  %v1620 = vpop.f32.mrb[0].mxu0
  %v1621 = vpop.f32.mrb[0].mxu0
  %v1622 = vpop.f32.mrb[0].mxu0
  %1623 = vdwg.mxu0
  %v1624 = vmax.f32 %v1563, 0.0
  %v1625 = vmax.f32 %v1566, 0.0
  %v1626 = vmax.f32 %v1571, 0.0
  %v1627 = vmax.f32 %v1574, 0.0
  %v1628 = vmax.f32 %v1579, 0.0
  %v1629 = vmax.f32 %v1582, 0.0
  %v1630 = vmax.f32 %v1587, 0.0
  %v1631 = vmax.f32 %v1590, 0.0
  %v1632 = vmax.f32 %v1595, 0.0
  %v1633 = vmax.f32 %v1598, 0.0
  %v1634 = vmax.f32 %v1603, 0.0
  %v1635 = vmax.f32 %v1606, 0.0
  %v1636 = vmax.f32 %v1611, 0.0
  %v1637 = vmax.f32 %v1614, 0.0
  %v1638 = vmax.f32 %v1619, 0.0
  %1639 = vst.msk [vmem:[#allocation4] sm:$0xff] %vm1457, 0.0
  %1640 = vst.msk [vmem:[#allocation4 + $0x8] sm:$0xff] %vm1457, 0.0
  %1641 = vst.msk [vmem:[#allocation4 + $0x10] sm:$0xff] %vm1457, 0.0
  %1642 = vst.msk [vmem:[#allocation4 + $0x18] sm:$0xff] %vm1457, 0.0
  %1643 = vst.msk [vmem:[#allocation4 + $0x20] sm:$0xff] %vm1457, 0.0
  %1644 = vst.msk [vmem:[#allocation4 + $0x28] sm:$0xff] %vm1457, 0.0
  %1645 = vst.msk [vmem:[#allocation4 + $0x30] sm:$0xff] %vm1457, 0.0
  %1646 = vst.msk [vmem:[#allocation4 + $0x38] sm:$0xff] %vm1457, 0.0
  %1647 = vst.msk [vmem:[#allocation4 + $0x40] sm:$0xff] %vm1457, 0.0
  %1648 = vst.msk [vmem:[#allocation4 + $0x48] sm:$0xff] %vm1457, 0.0
  %1649 = vst.msk [vmem:[#allocation4 + $0x50] sm:$0xff] %vm1457, 0.0
  %1650 = vst.msk [vmem:[#allocation4 + $0x58] sm:$0xff] %vm1457, 0.0
  %1651 = vst.msk [vmem:[#allocation4 + $0x60] sm:$0xff] %vm1457, 0.0
  %1652 = vst.msk [vmem:[#allocation4 + $0x68] sm:$0xff] %vm1457, 0.0
  %1653 = vst.msk [vmem:[#allocation4 + $0x70] sm:$0xff] %vm1457, 0.0
  %1654 = vst.msk [vmem:[#allocation4 + $0x78] sm:$0xff] %vm1457, 0.0
  %1655 = vst.msk [vmem:[#allocation4] sm:$0xff] %vm1457, %v1624
  %1656 = vst.msk [vmem:[#allocation4 + $0x8] sm:$0xff] %vm1457, %v1625
  %1657 = vst.msk [vmem:[#allocation4 + $0x10] sm:$0xff] %vm1457, %v1626
  %1658 = vst.msk [vmem:[#allocation4 + $0x18] sm:$0xff] %vm1457, %v1627
  %1659 = vst.msk [vmem:[#allocation4 + $0x20] sm:$0xff] %vm1457, %v1628
  %1660 = vst.msk [vmem:[#allocation4 + $0x28] sm:$0xff] %vm1457, %v1629
  %1661 = vst.msk [vmem:[#allocation4 + $0x30] sm:$0xff] %vm1457, %v1630
  %1662 = vst.msk [vmem:[#allocation4 + $0x38] sm:$0xff] %vm1457, %v1631
  %1663 = vst.msk [vmem:[#allocation4 + $0x40] sm:$0xff] %vm1457, %v1632
  %1664 = vst.msk [vmem:[#allocation4 + $0x48] sm:$0xff] %vm1457, %v1633
  %1665 = vst.msk [vmem:[#allocation4 + $0x50] sm:$0xff] %vm1457, %v1634
  %1666 = vst.msk [vmem:[#allocation4 + $0x58] sm:$0xff] %vm1457, %v1635
  %1667 = vst.msk [vmem:[#allocation4 + $0x60] sm:$0xff] %vm1457, %v1636
  %1668 = vst.msk [vmem:[#allocation4 + $0x68] sm:$0xff] %vm1457, %v1637
  %1669 = vst.msk [vmem:[#allocation4 + $0x70] sm:$0xff] %vm1457, %v1638
  %v1670 = vld [vmem:[#allocation4 + $0x1] sm:$0xff]
  %v1671 = vld [vmem:[#allocation4 + $0x9] sm:$0xff]
  %v1672 = vld [vmem:[#allocation4 + $0x11] sm:$0xff]
  %v1673 = vld [vmem:[#allocation4 + $0x19] sm:$0xff]
  %v1674 = vld [vmem:[#allocation4 + $0x21] sm:$0xff]
  %v1675 = vld [vmem:[#allocation4 + $0x29] sm:$0xff]
  %v1676 = vld [vmem:[#allocation4 + $0x31] sm:$0xff]
  %v1677 = vld [vmem:[#allocation4 + $0x39] sm:$0xff]
  %v1678 = vld [vmem:[#allocation4 + $0x41] sm:$0xff]
  %v1679 = vld [vmem:[#allocation4 + $0x49] sm:$0xff]
  %v1680 = vld [vmem:[#allocation4 + $0x51] sm:$0xff]
  %v1681 = vld [vmem:[#allocation4 + $0x59] sm:$0xff]
  %v1682 = vld [vmem:[#allocation4 + $0x61] sm:$0xff]
  %v1683 = vld [vmem:[#allocation4 + $0x69] sm:$0xff]
  %v1684 = vld [vmem:[#allocation4 + $0x71] sm:$0xff]
  %v1685 = vmax.f32 %v1624, %v1670
  %v1686 = vmax.f32 %v1625, %v1671
  %v1687 = vmax.f32 %v1626, %v1672
  %v1688 = vmax.f32 %v1627, %v1673
  %v1689 = vmax.f32 %v1628, %v1674
  %v1690 = vmax.f32 %v1629, %v1675
  %v1691 = vmax.f32 %v1630, %v1676
  %v1692 = vmax.f32 %v1631, %v1677
  %v1693 = vmax.f32 %v1632, %v1678
  %v1694 = vmax.f32 %v1633, %v1679
  %v1695 = vmax.f32 %v1634, %v1680
  %v1696 = vmax.f32 %v1635, %v1681
  %v1697 = vmax.f32 %v1636, %v1682
  %v1698 = vmax.f32 %v1637, %v1683
  %v1699 = vmax.f32 %v1638, %v1684
  %1700 = vst.msk [vmem:[#allocation4] sm:$0xff] %vm1457, %v1685
  %1701 = vst.msk [vmem:[#allocation4 + $0x8] sm:$0xff] %vm1457, %v1686
  %1702 = vst.msk [vmem:[#allocation4 + $0x10] sm:$0xff] %vm1457, %v1687
  %1703 = vst.msk [vmem:[#allocation4 + $0x18] sm:$0xff] %vm1457, %v1688
  %1704 = vst.msk [vmem:[#allocation4 + $0x20] sm:$0xff] %vm1457, %v1689
  %1705 = vst.msk [vmem:[#allocation4 + $0x28] sm:$0xff] %vm1457, %v1690
  %1706 = vst.msk [vmem:[#allocation4 + $0x30] sm:$0xff] %vm1457, %v1691
  %1707 = vst.msk [vmem:[#allocation4 + $0x38] sm:$0xff] %vm1457, %v1692
  %1708 = vst.msk [vmem:[#allocation4 + $0x40] sm:$0xff] %vm1457, %v1693
  %1709 = vst.msk [vmem:[#allocation4 + $0x48] sm:$0xff] %vm1457, %v1694
  %1710 = vst.msk [vmem:[#allocation4 + $0x50] sm:$0xff] %vm1457, %v1695
  %1711 = vst.msk [vmem:[#allocation4 + $0x58] sm:$0xff] %vm1457, %v1696
  %1712 = vst.msk [vmem:[#allocation4 + $0x60] sm:$0xff] %vm1457, %v1697
  %1713 = vst.msk [vmem:[#allocation4 + $0x68] sm:$0xff] %vm1457, %v1698
  %1714 = vst.msk [vmem:[#allocation4 + $0x70] sm:$0xff] %vm1457, %v1699
  %v1715 = vld [vmem:[#allocation4] ss:$30 sm:$0xf]
  %s1716 = scalar_lea.vmem [#allocation4], 2
  %v1717 = vld [vmem:[%s1716] ss:$30 sm:$0xf]
  %s1718 = scalar_lea.vmem [#allocation4], 4
  %v1719 = vld [vmem:[%s1718] ss:$30 sm:$0xf]
  %s1720 = scalar_lea.vmem [#allocation4], 6
  %v1721 = vld [vmem:[%s1720] ss:$30 sm:$0xf]
  %s1722 = scalar_lea.vmem [#allocation4], 8
  %v1723 = vld [vmem:[%s1722] ss:$30 sm:$0xf]
  %s1724 = scalar_lea.vmem [#allocation4], 10
  %v1725 = vld [vmem:[%s1724] ss:$30 sm:$0xf]
  %s1726 = scalar_lea.vmem [#allocation4], 12
  %v1727 = vld [vmem:[%s1726] ss:$30 sm:$0xf]
  %s1728 = scalar_lea.vmem [#allocation4], 14
  %v1729 = vld [vmem:[%s1728] ss:$30 sm:$0xf]
  %s1730 = scalar_lea.vmem [#allocation4], 16
  %v1731 = vld [vmem:[%s1730] ss:$30 sm:$0xf]
  %s1732 = scalar_lea.vmem [#allocation4], 18
  %v1733 = vld [vmem:[%s1732] ss:$30 sm:$0xf]
  %s1734 = scalar_lea.vmem [#allocation4], 20
  %v1735 = vld [vmem:[%s1734] ss:$30 sm:$0xf]
  %s1736 = scalar_lea.vmem [#allocation4], 22
  %v1737 = vld [vmem:[%s1736] ss:$30 sm:$0xf]
  %s1738 = scalar_lea.vmem [#allocation4], 24
  %v1739 = vld [vmem:[%s1738] ss:$30 sm:$0xf]
  %s1740 = scalar_lea.vmem [#allocation4], 26
  %v1741 = vld [vmem:[%s1740] ss:$30 sm:$0xf]
  %s1742 = scalar_lea.vmem [#allocation4], 28
  %v1743 = vld [vmem:[%s1742] ss:$30 sm:$0xf]
  %1745 = vrot.lane.b32.xlu0 %v1717, 16
  %v1746 = vpop.permute.xlu0 %1745
  %1749 = vrot.lane.b32.xlu0 %v1719, 32
  %v1750 = vpop.permute.xlu0 %1749
  %1753 = vrot.lane.b32.xlu0 %v1721, 48
  %v1754 = vpop.permute.xlu0 %1753
  %1757 = vrot.lane.b32.xlu0 %v1723, 64
  %v1758 = vpop.permute.xlu0 %1757
  %1761 = vrot.lane.b32.xlu0 %v1725, 80
  %v1762 = vpop.permute.xlu0 %1761
  %1765 = vrot.lane.b32.xlu0 %v1727, 96
  %v1766 = vpop.permute.xlu0 %1765
  %1769 = vrot.lane.b32.xlu0 %v1729, 112
  %v1770 = vpop.permute.xlu0 %1769
  %1773 = vrot.lane.b32.xlu0 %v1733, 16
  %v1774 = vpop.permute.xlu0 %1773
  %1777 = vrot.lane.b32.xlu0 %v1735, 32
  %v1778 = vpop.permute.xlu0 %1777
  %1781 = vrot.lane.b32.xlu0 %v1737, 48
  %v1782 = vpop.permute.xlu0 %1781
  %1785 = vrot.lane.b32.xlu0 %v1739, 64
  %v1786 = vpop.permute.xlu0 %1785
  %1789 = vrot.lane.b32.xlu0 %v1741, 80
  %v1790 = vpop.permute.xlu0 %1789
  %1793 = vrot.lane.b32.xlu0 %v1743, 96
  %v1794 = vpop.permute.xlu0 %1793
  %v1796 = vsel %vm1457, %v1715, %v1746
  %vm1797 = vcmask 261120
  %v1798 = vsel %vm1797, %v1796, %v1750
  %vm1799 = vcmask 392192
  %v1800 = vsel %vm1799, %v1798, %v1754
  %vm1801 = vcmask 523264
  %v1802 = vsel %vm1801, %v1800, %v1758
  %vm1803 = vcmask 654336
  %v1804 = vsel %vm1803, %v1802, %v1762
  %vm1805 = vcmask 785408
  %v1806 = vsel %vm1805, %v1804, %v1766
  %vm1807 = vcmask 916480
  %v1808 = vsel %vm1807, %v1806, %v1770
  %v1809 = vsel %vm1457, %v1731, %v1774
  %v1810 = vsel %vm1797, %v1809, %v1778
  %v1811 = vsel %vm1799, %v1810, %v1782
  %v1812 = vsel %vm1801, %v1811, %v1786
  %v1813 = vsel %vm1803, %v1812, %v1790
  %v1814 = vsel %vm1805, %v1813, %v1794
  %v1815 = vpack.c.bf16 %v1808, %v1808
  %v1816 = vpack.c.bf16 %v1814, %v1814
  %v1817 = vld [vmem:[%s3] sm:$0xf]
  %v1818 = vld [vmem:[%s3 + $0x4] sm:$0xf]
  %v1819 = vld [vmem:[%s3 + $0x8] sm:$0xf]
  %v1820 = vld [vmem:[%s3 + $0xc] sm:$0xf]
  %v1821 = vld [vmem:[%s3 + $0x10] sm:$0xf]
  %v1822 = vld [vmem:[%s3 + $0x14] sm:$0xf]
  %v1823 = vld [vmem:[%s3 + $0x18] sm:$0xf]
  %v1824 = vld [vmem:[%s3 + $0x1c] sm:$0xf]
  %v1825 = vld [vmem:[%s3 + $0x20] sm:$0xf]
  %v1826 = vld [vmem:[%s3 + $0x24] sm:$0xf]
  %v1827 = vld [vmem:[%s3 + $0x28] sm:$0xf]
  %v1828 = vld [vmem:[%s3 + $0x2c] sm:$0xf]
  %v1829 = vld [vmem:[%s3 + $0x30] sm:$0xf]
  %v1830 = vld [vmem:[%s3 + $0x34] sm:$0xf]
  %v1831 = vld [vmem:[%s3 + $0x38] sm:$0xf]
  %v1832 = vld [vmem:[%s3 + $0x3c] sm:$0xf]
  %v1833 = vld [vmem:[%s3 + $0x40] sm:$0xf]
  %v1834 = vld [vmem:[%s3 + $0x44] sm:$0xf]
  %v1835 = vld [vmem:[%s3 + $0x48] sm:$0xf]
  %v1836 = vld [vmem:[%s3 + $0x4c] sm:$0xf]
  %v1837 = vld [vmem:[%s3 + $0x50] sm:$0xf]
  %v1838 = vld [vmem:[%s3 + $0x54] sm:$0xf]
  %v1839 = vld [vmem:[%s3 + $0x58] sm:$0xf]
  %v1840 = vld [vmem:[%s3 + $0x5c] sm:$0xf]
  %v1841 = vld [vmem:[%s3 + $0x60] sm:$0xf]
  %v1842 = vld [vmem:[%s3 + $0x64] sm:$0xf]
  %v1843 = vld [vmem:[%s3 + $0x68] sm:$0xf]
  %v1844 = vld [vmem:[%s3 + $0x6c] sm:$0xf]
  %v1845 = vld [vmem:[%s3 + $0x70] sm:$0xf]
  %v1846 = vld [vmem:[%s3 + $0x74] sm:$0xf]
  %v1848 = vlaneseq
  %v1849 = vshrl.u32 %v1848, 7
  %v1850 = vsub.s32 0, %v1849
  %v1851 = vrot.slane %v26, %v1850
  %v1883 = vunpack.c.l.b16 %v1817
  %v1884 = vunpack.c.l.b16 %v1818
  %v1885 = vunpack.c.l.b16 %v1819
  %v1886 = vunpack.c.l.b16 %v1820
  %v1887 = vunpack.c.l.b16 %v1821
  %v1888 = vunpack.c.l.b16 %v1822
  %v1889 = vunpack.c.l.b16 %v1823
  %v1890 = vunpack.c.l.b16 %v1824
  %v1891 = vunpack.c.l.b16 %v1825
  %v1892 = vunpack.c.l.b16 %v1826
  %v1893 = vunpack.c.l.b16 %v1827
  %v1894 = vunpack.c.l.b16 %v1828
  %v1895 = vunpack.c.l.b16 %v1829
  %v1896 = vunpack.c.l.b16 %v1830
  %v1897 = vunpack.c.l.b16 %v1831
  %v1898 = vunpack.c.l.b16 %v1832
  %v1899 = vunpack.c.l.b16 %v1833
  %v1900 = vunpack.c.l.b16 %v1834
  %v1901 = vunpack.c.l.b16 %v1835
  %v1902 = vunpack.c.l.b16 %v1836
  %v1903 = vunpack.c.l.b16 %v1837
  %v1904 = vunpack.c.l.b16 %v1838
  %v1905 = vunpack.c.l.b16 %v1839
  %v1906 = vunpack.c.l.b16 %v1840
  %v1907 = vunpack.c.l.b16 %v1841
  %v1908 = vunpack.c.l.b16 %v1842
  %v1909 = vunpack.c.l.b16 %v1843
  %v1910 = vunpack.c.l.b16 %v1844
  %v1911 = vunpack.c.l.b16 %v1845
  %v1912 = vunpack.c.l.b16 %v1846
  %v1913 = vpack.c.b16 %v1884, %v1883
  %v1914 = vpack.c.b16 %v1886, %v1885
  %v1915 = vpack.c.b16 %v1888, %v1887
  %v1916 = vpack.c.b16 %v1890, %v1889
  %v1917 = vpack.c.b16 %v1892, %v1891
  %v1918 = vpack.c.b16 %v1894, %v1893
  %v1919 = vpack.c.b16 %v1896, %v1895
  %v1920 = vpack.c.b16 %v1898, %v1897
  %v1921 = vpack.c.b16 %v1900, %v1899
  %v1922 = vpack.c.b16 %v1902, %v1901
  %v1923 = vpack.c.b16 %v1904, %v1903
  %v1924 = vpack.c.b16 %v1906, %v1905
  %v1925 = vpack.c.b16 %v1908, %v1907
  %v1926 = vpack.c.b16 %v1910, %v1909
  %v1927 = vpack.c.b16 %v1912, %v1911
  %v1944 = vsel %vm1807, %v1816, 0
  %1946 = vmatprep.subr.bf16.mxu0 0
  %1947 = vmatpush1.bf16.msra.mxu0 %v1913
  %1948 = vmatprep.subr.bf16.mxu0 0
  %1949 = vmatpush1.bf16.msra.mxu0 %v1914
  %1950 = vmatprep.subr.bf16.mxu0 0
  %1951 = vmatpush1.bf16.msra.mxu0 %v1915
  %1952 = vmatprep.subr.bf16.mxu0 0
  %1953 = vmatpush1.bf16.msra.mxu0 %v1916
  %1954 = vmatprep.subr.bf16.mxu0 0
  %1955 = vmatpush1.bf16.msra.mxu0 %v1917
  %1956 = vmatprep.subr.bf16.mxu0 0
  %1957 = vmatpush1.bf16.msra.mxu0 %v1918
  %1958 = vmatprep.subr.bf16.mxu0 0
  %1959 = vmatpush1.bf16.msra.mxu0 %v1919
  %1960 = vmatprep.subr.bf16.mxu0 0
  %1961 = vmatpush1.bf16.msra.mxu0 %v1920
  %1962 = vmatprep.subr.bf16.mxu0 0
  %1963 = vmatpush1.bf16.msra.mxu0 %v1921
  %1964 = vmatprep.subr.bf16.mxu0 0
  %1965 = vmatpush1.bf16.msra.mxu0 %v1922
  %1966 = vmatprep.subr.bf16.mxu0 0
  %1967 = vmatpush1.bf16.msra.mxu0 %v1923
  %1968 = vmatprep.subr.bf16.mxu0 0
  %1969 = vmatpush1.bf16.msra.mxu0 %v1924
  %1970 = vmatprep.subr.bf16.mxu0 0
  %1971 = vmatpush1.bf16.msra.mxu0 %v1925
  %1972 = vmatprep.subr.bf16.mxu0 0
  %1973 = vmatpush1.bf16.msra.mxu0 %v1926
  %1974 = vmatprep.subr.bf16.mxu0 0
  %1975 = vmatpush1.bf16.msra.mxu0 %v1927
  %1976 = vmatprep.subr.bf16.mxu0 0
  %1977 = vmatpush1.bf16.msra.mxu0 0
  %1978 = vmatprep.mubr.bf16.mxu0 %v1944
  %1979 = vmatmul.mubr.bf16.gmra.mrb[0].mxu0 %v1815
  %v1980 = vpop.f32.mrb[0].mxu0
  %v1981 = vadd.f32 %v1851, %v1980
  %v1982 = vpop.f32.mrb[0].mxu0
  %v1983 = vpop.f32.mrb[0].mxu0
  %v1984 = vpop.f32.mrb[0].mxu0
  %1985 = vdwg.mxu0
  %v1986 = vmax.f32 %v1981, 0.0
  %v1987 = vpack.c.bf16 %v1986, %v1986
  %v1988 = vld [vmem:[%s4] sm:$0xf]
  %v1989 = vld [vmem:[%s4 + $0x4] sm:$0xf]
  %v1990 = vld [vmem:[%s4 + $0x8] sm:$0xf]
  %v1991 = vld [vmem:[%s4 + $0xc] sm:$0xf]
  %v1992 = vld [vmem:[%s4 + $0x10] sm:$0xf]
  %v1993 = vld [vmem:[%s4 + $0x14] sm:$0xf]
  %v1994 = vld [vmem:[%s4 + $0x18] sm:$0xf]
  %v1995 = vld [vmem:[%s4 + $0x1c] sm:$0xf]
  %v1996 = vld [vmem:[%s4 + $0x20] sm:$0xf]
  %v1997 = vld [vmem:[%s4 + $0x24] sm:$0xf]
  %v1998 = vld [vmem:[%s4 + $0x28] sm:$0xf]
  %v1999 = vld [vmem:[%s4 + $0x2c] sm:$0xf]
  %v2000 = vld [vmem:[%s4 + $0x30] sm:$0xf]
  %v2001 = vld [vmem:[%s4 + $0x34] sm:$0xf]
  %v2002 = vld [vmem:[%s4 + $0x38] sm:$0xf]
  %v2004 = vlaneseq
  %v2005 = vshrl.u32 %v2004, 7
  %v2006 = vsub.s32 0, %v2005
  %v2007 = vrot.slane %v27, %v2006
  %v2024 = vunpack.c.l.b16 %v1988
  %v2025 = vunpack.c.l.b16 %v1989
  %v2026 = vunpack.c.l.b16 %v1990
  %v2027 = vunpack.c.l.b16 %v1991
  %v2028 = vunpack.c.l.b16 %v1992
  %v2029 = vunpack.c.l.b16 %v1993
  %v2030 = vunpack.c.l.b16 %v1994
  %v2031 = vunpack.c.l.b16 %v1995
  %v2032 = vunpack.c.l.b16 %v1996
  %v2033 = vunpack.c.l.b16 %v1997
  %v2034 = vunpack.c.l.b16 %v1998
  %v2035 = vunpack.c.l.b16 %v1999
  %v2036 = vunpack.c.l.b16 %v2000
  %v2037 = vunpack.c.l.b16 %v2001
  %v2038 = vunpack.c.l.b16 %v2002
  %v2039 = vpack.c.b16 %v2025, %v2024
  %v2040 = vpack.c.b16 %v2027, %v2026
  %v2041 = vpack.c.b16 %v2029, %v2028
  %v2042 = vpack.c.b16 %v2031, %v2030
  %v2043 = vpack.c.b16 %v2033, %v2032
  %v2044 = vpack.c.b16 %v2035, %v2034
  %v2045 = vpack.c.b16 %v2037, %v2036
  %v2046 = vpack.c.b16 %v2038, %v2038
  %vm2054 = vcmask 982016
  %v2056 = vsel %vm2054, %v1987, 0
  %v2059 = vsel %vm1524, %v2046, 0
  %2061 = vmatprep.subr.bf16.mxu0 0
  %2062 = vmatpush1.bf16.msra.mxu0 %v2039
  %2063 = vmatprep.subr.bf16.mxu0 0
  %2064 = vmatpush1.bf16.msra.mxu0 %v2040
  %2065 = vmatprep.subr.bf16.mxu0 0
  %2066 = vmatpush1.bf16.msra.mxu0 %v2041
  %2067 = vmatprep.subr.bf16.mxu0 0
  %2068 = vmatpush1.bf16.msra.mxu0 %v2042
  %2069 = vmatprep.subr.bf16.mxu0 0
  %2070 = vmatpush1.bf16.msra.mxu0 %v2043
  %2071 = vmatprep.subr.bf16.mxu0 0
  %2072 = vmatpush1.bf16.msra.mxu0 %v2044
  %2073 = vmatprep.subr.bf16.mxu0 0
  %2074 = vmatpush1.bf16.msra.mxu0 %v2045
  %2075 = vmatprep.subr.bf16.mxu0 0
  %2076 = vmatpush1.bf16.msra.mxu0 %v2059
  %2077 = vmatprep.subr.bf16.mxu0 0
  %2078 = vmatpush1.bf16.msra.mxu0 0
  %2079 = vmatprep.subr.bf16.mxu0 0
  %2080 = vmatpush1.bf16.msra.mxu0 0
  %2081 = vmatprep.subr.bf16.mxu0 0
  %2082 = vmatpush1.bf16.msra.mxu0 0
  %2083 = vmatprep.subr.bf16.mxu0 0
  %2084 = vmatpush1.bf16.msra.mxu0 0
  %2085 = vmatprep.subr.bf16.mxu0 0
  %2086 = vmatpush1.bf16.msra.mxu0 0
  %2087 = vmatprep.subr.bf16.mxu0 0
  %2088 = vmatpush1.bf16.msra.mxu0 0
  %2089 = vmatprep.subr.bf16.mxu0 0
  %2090 = vmatpush1.bf16.msra.mxu0 0
  %2091 = vmatprep.subr.bf16.mxu0 0
  %2092 = vmatpush1.bf16.msra.mxu0 0
  %2093 = vmatprep.mubr.bf16.mxu0 0
  %2094 = vmatmul.mubr.bf16.gmra.mrb[0].mxu0 %v2056
  %v2095 = vpop.f32.mrb[0].mxu0
  %v2096 = vadd.f32 %v2007, %v2095
  %v2097 = vpop.f32.mrb[0].mxu0
  %v2098 = vpop.f32.mrb[0].mxu0
  %v2099 = vpop.f32.mrb[0].mxu0
  %2100 = vdwg.mxu0
  %vm2101 = vcmask 3072
  %2102 = vst.msk [vmem:[%s6] sm:$0xf] %vm2101, %v2096
  // Predicated region
  $region26: #{pairwise_cnn_forward.1} parent=0 // pred_check
    _
  $region27: #{pairwise_cnn_forward.1} parent=0 // pred_check_branch
    %2104 = sbr.rel (0) target = $region29
  $region28: #{pairwise_cnn_forward.1} parent=0 // pred_region
    _
  $region29: #{pairwise_cnn_forward.1} parent=0 // pred_fallthru
    _
  // Predicated region
  $region30: #{pairwise_cnn_forward.1} parent=0 // pred_check
    _
  $region31: #{pairwise_cnn_forward.1} parent=0 // pred_check_branch
    %2106 = sbr.rel (0) target = $region33
  $region32: #{pairwise_cnn_forward.1} parent=0 // pred_region
    _
  $region33: #{pairwise_cnn_forward.1} parent=0 // pred_fallthru
    _

</llo_original>
